<compile_context>
chip_gen: v7x
topology: tpu7x:2x2x1
jax: 0.10.0
libtpu: 0.0.40
codegen_flags: <defaults>
</compile_context>

<pallas_src>
import functools

import jax
import jax.numpy as jnp
from jax import lax
from jax.experimental import pallas as pl
from jax.experimental.pallas import tpu as pltpu


def spatial_gate_kernel(x_ref, w0_ref, b0_ref, w1_ref, b1_ref, w2_ref, b2_ref,
                        wf_ref, bf_ref, mask_ref, o_ref, *, W, dil):
    """One block of B samples per grid step.

    x_ref   : (B, C, HW)      input block (bf16 or f32)
    w0_ref  : (Crp, C)        1x1 reduce conv (BN folded), dtype == x dtype
    b0_ref  : (Crp, 1)        f32
    w1_ref  : (9, Crp, Crp)   dilated 3x3 conv #0, one (out,in) matrix per tap
    b1_ref  : (Crp, 1)
    w2_ref  : (9, Crp, Crp)   dilated 3x3 conv #1
    b2_ref  : (Crp, 1)
    wf_ref  : (1, Crp)        final 1x1 conv -> single channel
    bf_ref  : (1, 1)
    mask_ref: (9, HW)         f32 1.0/0.0 tap-validity masks (also kill wrap)
    o_ref   : (B, 1, HW)      single-channel gate (broadcast over C in wrapper)
    """
    B, _, HW = x_ref.shape

    # Tap enumeration order = (kh, kw) row-major; matches wrapper weight/mask order.
    offs = [(dh, dw) for dh in (-dil, 0, dil) for dw in (-dil, 0, dil)]

    # Hoist all parameter / mask loads out of the per-sample loop.
    w0 = w0_ref[...]
    b0 = b0_ref[...]
    b1 = b1_ref[...]
    b2 = b2_ref[...]
    wf = wf_ref[...]
    bf = bf_ref[...]
    w1_taps = [w1_ref[k] for k in range(9)]
    w2_taps = [w2_ref[k] for k in range(9)]
    masks = [None if off == (0, 0) else mask_ref[k:k + 1, :]
             for k, off in enumerate(offs)]

    def dilated_conv(y, w_taps, bias):
        # 9 accumulating (Crp,Crp)x(Crp,HW) dots over roll-shifted, masked taps.
        # roll(y, -s)[i] == y[(i+s) mod HW]; every wrapped / out-of-range lane is
        # zeroed by the tap mask, reproducing the conv's zero padding exactly.
        acc = None
        for k, (dh, dw) in enumerate(offs):
            s = dh * W + dw
            tap = y if s == 0 else pltpu.roll(y, (-s) % HW, 1)
            if masks[k] is not None:
                tap = tap * masks[k]                      # (1,HW) sublane-bcast
            c = jnp.dot(w_taps[k], tap, preferred_element_type=jnp.float32)
            acc = c if acc is None else acc + c
        return jnp.maximum(acc + bias, 0.0)

    # Per-sample loop (B is a small static constant; unrolled).  Every op below
    # is a plain 2-D matmul / elementwise on a (Crp, HW) slab -- no in-kernel
    # transposes or batched dot_generals.
    for b in range(B):
        xb = x_ref[b]                                      # (C, HW)
        # gate_s_conv_reduce0 (1x1 conv, BN folded) + ReLU
        y = jnp.dot(w0, xb, preferred_element_type=jnp.float32) + b0
        y = jnp.maximum(y, 0.0)                            # (Crp, HW) f32
        # gate_s_conv_di_0 / _1 (3x3, dilation=4, padding=4) + BN + ReLU
        y = dilated_conv(y, w1_taps, b1)
        y = dilated_conv(y, w2_taps, b2)
        # gate_s_conv_final (1x1 conv -> 1 channel)
        gate = jnp.dot(wf, y, preferred_element_type=jnp.float32) + bf
        o_ref[b] = gate.astype(o_ref.dtype)                # (1, HW)


def spatial_gate_pallas(x, p, *, dilation_val=4, eps=1e-5, block_batch=8,
                        compute_dtype=jnp.bfloat16):
    N, C, H, W = x.shape
    Cr = p["w0"].shape[0]
    HW = H * W
    d = dilation_val
    Crp = max(8, ((Cr + 7) // 8) * 8)   # reduced channels padded to a sublane tile

    # Fold eval-mode BatchNorm into the preceding conv (scale rows + shift bias).
    def fold(w, b, g, be, m, v):
        s = g / jnp.sqrt(v + eps)
        return w * s.reshape((-1,) + (1,) * (w.ndim - 1)), s * (b - m) + be

    w0f, b0f = fold(p["w0"], p["b0"], p["g0"], p["be0"], p["m0"], p["v0"])
    w1f, b1f = fold(p["w1"], p["b1"], p["g1"], p["be1"], p["m1"], p["v1"])
    w2f, b2f = fold(p["w2"], p["b2"], p["g2"], p["be2"], p["m2"], p["v2"])

    def pad_axis(a, axis, new):
        pads = [(0, 0)] * a.ndim
        pads[axis] = (0, new - a.shape[axis])
        return jnp.pad(a, pads)

    # 1x1 reduce conv, padded to Crp output rows (extra rows compute exact 0).
    w0p = pad_axis(w0f, 0, Crp).astype(compute_dtype)          # (Crp, C)
    b0p = pad_axis(b0f, 0, Crp).reshape(Crp, 1)

    # Dilated convs: (Cr,Cr,3,3) -> (9, Crp, Crp); row k = kh*3 + kw matches the
    # tap enumeration order inside the kernel.
    def per_tap(wf4):
        w4 = pad_axis(pad_axis(wf4, 0, Crp), 1, Crp)           # (Crp, Crp, 3, 3)
        return jnp.transpose(w4, (2, 3, 0, 1)).reshape(9, Crp, Crp)

    w1t = per_tap(w1f)
    b1p = pad_axis(b1f, 0, Crp).reshape(Crp, 1)
    w2t = per_tap(w2f)
    b2p = pad_axis(b2f, 0, Crp).reshape(Crp, 1)
    wfp = pad_axis(p["wf"], 1, Crp)                            # (1, Crp)
    bff = p["bf"].reshape(1, 1)

    # Per-tap validity masks: depend only on the spatial position, so build once
    # here (kernel-resident (9, HW) input) instead of per-step iota/mod/div.
    pos = jnp.arange(HW, dtype=jnp.int32)
    hc, wc = pos // W, pos % W
    rows = []
    for dh in (-d, 0, d):
        for dw in (-d, 0, d):
            ok = jnp.ones((HW,), jnp.bool_)
            if dh < 0:
                ok = ok & (hc >= -dh)
            if dh > 0:
                ok = ok & (hc < H - dh)
            if dw < 0:
                ok = ok & (wc >= -dw)
            if dw > 0:
                ok = ok & (wc < W - dw)
            rows.append(ok)
    mask = jnp.stack(rows).astype(jnp.float32)                 # (9, HW)

    # Batch blocking: no divisibility requirement (ragged N is zero-padded and
    # sliced off), and the grid has >= 2 steps whenever N >= 2 so both v7x
    # TensorCores get work on the "parallel" axis.
    if N <= 1:
        B = 1
    else:
        B = min(block_batch, (N + 1) // 2)
    G = (N + B - 1) // B
    N_pad = G * B

    xr = x.reshape(N, C, HW).astype(compute_dtype)             # free view + cast
    if N_pad != N:
        xr = jnp.pad(xr, ((0, N_pad - N), (0, 0), (0, 0)))

    kernel = functools.partial(spatial_gate_kernel, W=W, dil=d)

    flops = 2 * N_pad * HW * (Crp * C + 2 * 9 * Crp * Crp + Crp)
    param_bytes = sum(int(a.size) * a.dtype.itemsize
                      for a in (w0p, b0p, w1t, b1p, w2t, b2p, wfp, bff, mask))
    bytes_accessed = (int(xr.size) * xr.dtype.itemsize
                      + N_pad * HW * x.dtype.itemsize + param_bytes)

    gate = pl.pallas_call(
        kernel,
        out_shape=jax.ShapeDtypeStruct((N_pad, 1, HW), x.dtype),
        grid_spec=pltpu.PrefetchScalarGridSpec(
            num_scalar_prefetch=0,
            grid=(G,),
            in_specs=[
                pl.BlockSpec((B, C, HW), lambda n: (n, 0, 0)),       # x block
                pl.BlockSpec((Crp, C), lambda n: (0, 0)),            # w0
                pl.BlockSpec((Crp, 1), lambda n: (0, 0)),            # b0
                pl.BlockSpec((9, Crp, Crp), lambda n: (0, 0, 0)),    # w1 taps
                pl.BlockSpec((Crp, 1), lambda n: (0, 0)),            # b1
                pl.BlockSpec((9, Crp, Crp), lambda n: (0, 0, 0)),    # w2 taps
                pl.BlockSpec((Crp, 1), lambda n: (0, 0)),            # b2
                pl.BlockSpec((1, Crp), lambda n: (0, 0)),            # wf
                pl.BlockSpec((1, 1), lambda n: (0, 0)),              # bf
                pl.BlockSpec((9, HW), lambda n: (0, 0)),             # tap masks
            ],
            out_specs=pl.BlockSpec((B, 1, HW), lambda n: (n, 0, 0)),
        ),
        compiler_params=pltpu.CompilerParams(
            dimension_semantics=("parallel",)),
        cost_estimate=pl.CostEstimate(flops=flops, transcendentals=0,
                                      bytes_accessed=bytes_accessed),
    )(xr, w0p, b0p, w1t, b1p, w2t, b2p, wfp, bff, mask)

    # expand_as(in_tensor): broadcast the single-channel gate over all C channels
    # lazily in XLA instead of materializing it from the kernel.
    gate = gate[:N].reshape(N, 1, H, W)
    return jnp.broadcast_to(gate, (N, C, H, W))


# ----------------------------- reference (plain JAX) ---------------------------
def spatial_gate_reference(x, p, eps=1e-5):
    def conv2d(h, w, b, *, dilation=1, padding=0):
        out = lax.conv_general_dilated(
            h, w, window_strides=(1, 1),
            padding=[(padding, padding), (padding, padding)],
            rhs_dilation=(dilation, dilation),
            dimension_numbers=("NCHW", "OIHW", "NCHW"))
        return out + b[None, :, None, None]

    def bn(h, g, be, m, v):
        s = (g / jnp.sqrt(v + eps))[None, :, None, None]
        return (h - m[None, :, None, None]) * s + be[None, :, None, None]

    h = conv2d(x, p["w0"][:, :, None, None], p["b0"])
    h = jax.nn.relu(bn(h, p["g0"], p["be0"], p["m0"], p["v0"]))
    h = conv2d(h, p["w1"], p["b1"], dilation=4, padding=4)
    h = jax.nn.relu(bn(h, p["g1"], p["be1"], p["m1"], p["v1"]))
    h = conv2d(h, p["w2"], p["b2"], dilation=4, padding=4)
    h = jax.nn.relu(bn(h, p["g2"], p["be2"], p["m2"], p["v2"]))
    h = conv2d(h, p["wf"][:, :, None, None], p["bf"])
    return jnp.broadcast_to(h, x.shape)


def init_params(key, C, Cr):
    ks = jax.random.split(key, 8)

    def u(k, shape, fan_in):
        bound = 1.0 / (fan_in ** 0.5)
        return jax.random.uniform(k, shape, jnp.float32, -bound, bound)

    p = {
        "w0": u(ks[0], (Cr, C), C),
        "b0": u(ks[1], (Cr,), C),
        "w1": u(ks[2], (Cr, Cr, 3, 3), Cr * 9),
        "b1": u(ks[3], (Cr,), Cr * 9),
        "w2": u(ks[4], (Cr, Cr, 3, 3), Cr * 9),
        "b2": u(ks[5], (Cr,), Cr * 9),
        "wf": u(ks[6], (1, Cr), Cr),
        "bf": u(ks[7], (1,), Cr),
    }
    # BatchNorm2d defaults (PyTorch): weight=1, bias=0, running_mean=0, running_var=1
    for i in ("0", "1", "2"):
        p["g" + i] = jnp.ones((Cr,), jnp.float32)
        p["be" + i] = jnp.zeros((Cr,), jnp.float32)
        p["m" + i] = jnp.zeros((Cr,), jnp.float32)
        p["v" + i] = jnp.ones((Cr,), jnp.float32)
    return p


if __name__ == "__main__":
    key = jax.random.PRNGKey(0)
    kx, kp = jax.random.split(key)

    N, C, H, W = 2, 64, 16, 16          # gate_channel=64, reduction_ratio=16 -> Cr=4
    Cr = C // 16

    x = jax.random.normal(kx, (N, C, H, W), jnp.float32)
    params = init_params(kp, C, Cr)

    ref = jax.block_until_ready(spatial_gate_reference(x, params))

    # f32 path: exact algorithm check (roll direction, tap/mask order, BN fold,
    # channel padding, batch blocking).
    out_f32 = jax.block_until_ready(
        spatial_gate_pallas(x, params, compute_dtype=jnp.float32))
    assert out_f32.shape == x.shape, (out_f32.shape, x.shape)
    err_f32 = float(jnp.max(jnp.abs(out_f32 - ref)))
    assert err_f32 < 1e-3, f"f32 path: max abs error vs reference: {err_f32}"

    # Default bf16 input-DMA path: error bounded by bf16 quantization of x / w0.
    out = jax.block_until_ready(spatial_gate_pallas(x, params))
    assert out.shape == x.shape, (out.shape, x.shape)
    err_bf16 = float(jnp.max(jnp.abs(out - ref)))
    assert err_bf16 < 5e-2, f"bf16 path: max abs error vs reference: {err_bf16}"

    print("KERNEL_OK")
</pallas_src>

<mosaic_0001>
module attributes {stable_mosaic.version = 11 : i64} {
  func.func @spatial_gate_kernel(%arg0: i32, %arg1: memref<1x64x256xf32, #tpu.memory_space<vmem>>, %arg2: memref<8x64xf32, #tpu.memory_space<vmem>>, %arg3: memref<8x1xf32, #tpu.memory_space<vmem>>, %arg4: memref<9x8x8xf32, #tpu.memory_space<vmem>>, %arg5: memref<8x1xf32, #tpu.memory_space<vmem>>, %arg6: memref<9x8x8xf32, #tpu.memory_space<vmem>>, %arg7: memref<8x1xf32, #tpu.memory_space<vmem>>, %arg8: memref<1x8xf32, #tpu.memory_space<vmem>>, %arg9: memref<1x1xf32, #tpu.memory_space<vmem>>, %arg10: memref<9x256xf32, #tpu.memory_space<vmem>>, %arg11: memref<1x1x256xf32, #tpu.memory_space<vmem>>) attributes {dimension_semantics = [#tpu.dimension_semantics<parallel>], iteration_bounds = array<i64: 2>, scalar_prefetch = 0 : i64, scratch_operands = 0 : i64, tpu.core_type = #tpu.core_type<tc>, window_params = [{transform_indices = @transform_0, window_bounds = array<i64: 1, 64, 256>}, {pipeline_mode = #tpu.pipeline_mode<synchronous>, transform_indices = @transform_1, window_bounds = array<i64: 8, 64>}, {pipeline_mode = #tpu.pipeline_mode<synchronous>, transform_indices = @transform_2, window_bounds = array<i64: 8, 1>}, {pipeline_mode = #tpu.pipeline_mode<synchronous>, transform_indices = @transform_3, window_bounds = array<i64: 9, 8, 8>}, {pipeline_mode = #tpu.pipeline_mode<synchronous>, transform_indices = @transform_4, window_bounds = array<i64: 8, 1>}, {pipeline_mode = #tpu.pipeline_mode<synchronous>, transform_indices = @transform_5, window_bounds = array<i64: 9, 8, 8>}, {pipeline_mode = #tpu.pipeline_mode<synchronous>, transform_indices = @transform_6, window_bounds = array<i64: 8, 1>}, {pipeline_mode = #tpu.pipeline_mode<synchronous>, transform_indices = @transform_7, window_bounds = array<i64: 1, 8>}, {pipeline_mode = #tpu.pipeline_mode<synchronous>, transform_indices = @transform_8, window_bounds = array<i64: 1, 1>}, {pipeline_mode = #tpu.pipeline_mode<synchronous>, transform_indices = @transform_9, window_bounds = array<i64: 9, 256>}, {transform_indices = @transform_10, window_bounds = array<i64: 1, 1, 256>}]} {
    %c0 = arith.constant 0 : index
    %c0_0 = arith.constant 0 : index
    %0 = vector.load %arg2[%c0, %c0_0] : memref<8x64xf32, #tpu.memory_space<vmem>>, vector<8x64xf32>
    %c0_1 = arith.constant 0 : index
    %c0_2 = arith.constant 0 : index
    %1 = vector.load %arg3[%c0_1, %c0_2] : memref<8x1xf32, #tpu.memory_space<vmem>>, vector<8x1xf32>
    %c0_3 = arith.constant 0 : index
    %c0_4 = arith.constant 0 : index
    %2 = vector.load %arg5[%c0_3, %c0_4] : memref<8x1xf32, #tpu.memory_space<vmem>>, vector<8x1xf32>
    %c0_5 = arith.constant 0 : index
    %c0_6 = arith.constant 0 : index
    %3 = vector.load %arg7[%c0_5, %c0_6] : memref<8x1xf32, #tpu.memory_space<vmem>>, vector<8x1xf32>
    %c0_7 = arith.constant 0 : index
    %c0_8 = arith.constant 0 : index
    %4 = vector.load %arg8[%c0_7, %c0_8] : memref<1x8xf32, #tpu.memory_space<vmem>>, vector<1x8xf32>
    %c0_9 = arith.constant 0 : index
    %c0_10 = arith.constant 0 : index
    %5 = vector.load %arg9[%c0_9, %c0_10] : memref<1x1xf32, #tpu.memory_space<vmem>>, vector<1x1xf32>
    %c0_11 = arith.constant 0 : index
    %c0_12 = arith.constant 0 : index
    %c0_13 = arith.constant 0 : index
    %6 = vector.load %arg4[%c0_11, %c0_12, %c0_13] : memref<9x8x8xf32, #tpu.memory_space<vmem>>, vector<1x8x8xf32>
    %7 = vector.shape_cast %6 : vector<1x8x8xf32> to vector<8x8xf32>
    %c1 = arith.constant 1 : index
    %c0_14 = arith.constant 0 : index
    %c0_15 = arith.constant 0 : index
    %8 = vector.load %arg4[%c1, %c0_14, %c0_15] : memref<9x8x8xf32, #tpu.memory_space<vmem>>, vector<1x8x8xf32>
    %9 = vector.shape_cast %8 : vector<1x8x8xf32> to vector<8x8xf32>
    %c2 = arith.constant 2 : index
    %c0_16 = arith.constant 0 : index
    %c0_17 = arith.constant 0 : index
    %10 = vector.load %arg4[%c2, %c0_16, %c0_17] : memref<9x8x8xf32, #tpu.memory_space<vmem>>, vector<1x8x8xf32>
    %11 = vector.shape_cast %10 : vector<1x8x8xf32> to vector<8x8xf32>
    %c3 = arith.constant 3 : index
    %c0_18 = arith.constant 0 : index
    %c0_19 = arith.constant 0 : index
    %12 = vector.load %arg4[%c3, %c0_18, %c0_19] : memref<9x8x8xf32, #tpu.memory_space<vmem>>, vector<1x8x8xf32>
    %13 = vector.shape_cast %12 : vector<1x8x8xf32> to vector<8x8xf32>
    %c4 = arith.constant 4 : index
    %c0_20 = arith.constant 0 : index
    %c0_21 = arith.constant 0 : index
    %14 = vector.load %arg4[%c4, %c0_20, %c0_21] : memref<9x8x8xf32, #tpu.memory_space<vmem>>, vector<1x8x8xf32>
    %15 = vector.shape_cast %14 : vector<1x8x8xf32> to vector<8x8xf32>
    %c5 = arith.constant 5 : index
    %c0_22 = arith.constant 0 : index
    %c0_23 = arith.constant 0 : index
    %16 = vector.load %arg4[%c5, %c0_22, %c0_23] : memref<9x8x8xf32, #tpu.memory_space<vmem>>, vector<1x8x8xf32>
    %17 = vector.shape_cast %16 : vector<1x8x8xf32> to vector<8x8xf32>
    %c6 = arith.constant 6 : index
    %c0_24 = arith.constant 0 : index
    %c0_25 = arith.constant 0 : index
    %18 = vector.load %arg4[%c6, %c0_24, %c0_25] : memref<9x8x8xf32, #tpu.memory_space<vmem>>, vector<1x8x8xf32>
    %19 = vector.shape_cast %18 : vector<1x8x8xf32> to vector<8x8xf32>
    %c7 = arith.constant 7 : index
    %c0_26 = arith.constant 0 : index
    %c0_27 = arith.constant 0 : index
    %20 = vector.load %arg4[%c7, %c0_26, %c0_27] : memref<9x8x8xf32, #tpu.memory_space<vmem>>, vector<1x8x8xf32>
    %21 = vector.shape_cast %20 : vector<1x8x8xf32> to vector<8x8xf32>
    %c8 = arith.constant 8 : index
    %c0_28 = arith.constant 0 : index
    %c0_29 = arith.constant 0 : index
    %22 = vector.load %arg4[%c8, %c0_28, %c0_29] : memref<9x8x8xf32, #tpu.memory_space<vmem>>, vector<1x8x8xf32>
    %23 = vector.shape_cast %22 : vector<1x8x8xf32> to vector<8x8xf32>
    %c0_30 = arith.constant 0 : index
    %c0_31 = arith.constant 0 : index
    %c0_32 = arith.constant 0 : index
    %24 = vector.load %arg6[%c0_30, %c0_31, %c0_32] : memref<9x8x8xf32, #tpu.memory_space<vmem>>, vector<1x8x8xf32>
    %25 = vector.shape_cast %24 : vector<1x8x8xf32> to vector<8x8xf32>
    %c1_33 = arith.constant 1 : index
    %c0_34 = arith.constant 0 : index
    %c0_35 = arith.constant 0 : index
    %26 = vector.load %arg6[%c1_33, %c0_34, %c0_35] : memref<9x8x8xf32, #tpu.memory_space<vmem>>, vector<1x8x8xf32>
    %27 = vector.shape_cast %26 : vector<1x8x8xf32> to vector<8x8xf32>
    %c2_36 = arith.constant 2 : index
    %c0_37 = arith.constant 0 : index
    %c0_38 = arith.constant 0 : index
    %28 = vector.load %arg6[%c2_36, %c0_37, %c0_38] : memref<9x8x8xf32, #tpu.memory_space<vmem>>, vector<1x8x8xf32>
    %29 = vector.shape_cast %28 : vector<1x8x8xf32> to vector<8x8xf32>
    %c3_39 = arith.constant 3 : index
    %c0_40 = arith.constant 0 : index
    %c0_41 = arith.constant 0 : index
    %30 = vector.load %arg6[%c3_39, %c0_40, %c0_41] : memref<9x8x8xf32, #tpu.memory_space<vmem>>, vector<1x8x8xf32>
    %31 = vector.shape_cast %30 : vector<1x8x8xf32> to vector<8x8xf32>
    %c4_42 = arith.constant 4 : index
    %c0_43 = arith.constant 0 : index
    %c0_44 = arith.constant 0 : index
    %32 = vector.load %arg6[%c4_42, %c0_43, %c0_44] : memref<9x8x8xf32, #tpu.memory_space<vmem>>, vector<1x8x8xf32>
    %33 = vector.shape_cast %32 : vector<1x8x8xf32> to vector<8x8xf32>
    %c5_45 = arith.constant 5 : index
    %c0_46 = arith.constant 0 : index
    %c0_47 = arith.constant 0 : index
    %34 = vector.load %arg6[%c5_45, %c0_46, %c0_47] : memref<9x8x8xf32, #tpu.memory_space<vmem>>, vector<1x8x8xf32>
    %35 = vector.shape_cast %34 : vector<1x8x8xf32> to vector<8x8xf32>
    %c6_48 = arith.constant 6 : index
    %c0_49 = arith.constant 0 : index
    %c0_50 = arith.constant 0 : index
    %36 = vector.load %arg6[%c6_48, %c0_49, %c0_50] : memref<9x8x8xf32, #tpu.memory_space<vmem>>, vector<1x8x8xf32>
    %37 = vector.shape_cast %36 : vector<1x8x8xf32> to vector<8x8xf32>
    %c7_51 = arith.constant 7 : index
    %c0_52 = arith.constant 0 : index
    %c0_53 = arith.constant 0 : index
    %38 = vector.load %arg6[%c7_51, %c0_52, %c0_53] : memref<9x8x8xf32, #tpu.memory_space<vmem>>, vector<1x8x8xf32>
    %39 = vector.shape_cast %38 : vector<1x8x8xf32> to vector<8x8xf32>
    %c8_54 = arith.constant 8 : index
    %c0_55 = arith.constant 0 : index
    %c0_56 = arith.constant 0 : index
    %40 = vector.load %arg6[%c8_54, %c0_55, %c0_56] : memref<9x8x8xf32, #tpu.memory_space<vmem>>, vector<1x8x8xf32>
    %41 = vector.shape_cast %40 : vector<1x8x8xf32> to vector<8x8xf32>
    %c0_57 = arith.constant 0 : index
    %c0_58 = arith.constant 0 : index
    %42 = vector.load %arg10[%c0_57, %c0_58] : memref<9x256xf32, #tpu.memory_space<vmem>>, vector<1x256xf32>
    %c1_59 = arith.constant 1 : index
    %c0_60 = arith.constant 0 : index
    %43 = vector.load %arg10[%c1_59, %c0_60] : memref<9x256xf32, #tpu.memory_space<vmem>>, vector<1x256xf32>
    %c2_61 = arith.constant 2 : index
    %c0_62 = arith.constant 0 : index
    %44 = vector.load %arg10[%c2_61, %c0_62] : memref<9x256xf32, #tpu.memory_space<vmem>>, vector<1x256xf32>
    %c3_63 = arith.constant 3 : index
    %c0_64 = arith.constant 0 : index
    %45 = vector.load %arg10[%c3_63, %c0_64] : memref<9x256xf32, #tpu.memory_space<vmem>>, vector<1x256xf32>
    %c5_65 = arith.constant 5 : index
    %c0_66 = arith.constant 0 : index
    %46 = vector.load %arg10[%c5_65, %c0_66] : memref<9x256xf32, #tpu.memory_space<vmem>>, vector<1x256xf32>
    %c6_67 = arith.constant 6 : index
    %c0_68 = arith.constant 0 : index
    %47 = vector.load %arg10[%c6_67, %c0_68] : memref<9x256xf32, #tpu.memory_space<vmem>>, vector<1x256xf32>
    %c7_69 = arith.constant 7 : index
    %c0_70 = arith.constant 0 : index
    %48 = vector.load %arg10[%c7_69, %c0_70] : memref<9x256xf32, #tpu.memory_space<vmem>>, vector<1x256xf32>
    %c8_71 = arith.constant 8 : index
    %c0_72 = arith.constant 0 : index
    %49 = vector.load %arg10[%c8_71, %c0_72] : memref<9x256xf32, #tpu.memory_space<vmem>>, vector<1x256xf32>
    %c0_73 = arith.constant 0 : index
    %c0_74 = arith.constant 0 : index
    %c0_75 = arith.constant 0 : index
    %50 = vector.load %arg1[%c0_73, %c0_74, %c0_75] : memref<1x64x256xf32, #tpu.memory_space<vmem>>, vector<1x64x256xf32>
    %51 = vector.shape_cast %50 : vector<1x64x256xf32> to vector<64x256xf32>
    %cst = arith.constant dense<0.000000e+00> : vector<8x256xf32>
    %52 = tpu.matmul %0, %51, %cst {dimension_numbers = #tpu.dot_dimension_numbers<[1], [0], [0], [1], [0, 0, 1, 1], [], []>} : vector<8x64xf32>, vector<64x256xf32>, vector<8x256xf32> -> vector<8x256xf32>
    %53 = vector.broadcast %1 : vector<8x1xf32> to vector<8x256xf32>
    %54 = arith.addf %52, %53 : vector<8x256xf32>
    %cst_76 = arith.constant 0.000000e+00 : f32
    %55 = vector.broadcast %cst_76 : f32 to vector<8x256xf32>
    %56 = arith.maximumf %54, %55 : vector<8x256xf32>
    %c68_i32 = arith.constant 68 : i32
    %57 = tpu.dynamic_rotate %56 by %c68_i32 dim 1 : vector<8x256xf32>, i32 -> vector<8x256xf32>
    %58 = vector.broadcast %42 : vector<1x256xf32> to vector<8x256xf32>
    %59 = arith.mulf %57, %58 : vector<8x256xf32>
    %cst_77 = arith.constant dense<0.000000e+00> : vector<8x256xf32>
    %60 = tpu.matmul %7, %59, %cst_77 {dimension_numbers = #tpu.dot_dimension_numbers<[1], [0], [0], [1], [0, 0, 1, 1], [], []>} : vector<8x8xf32>, vector<8x256xf32>, vector<8x256xf32> -> vector<8x256xf32>
    %c64_i32 = arith.constant 64 : i32
    %61 = tpu.dynamic_rotate %56 by %c64_i32 dim 1 : vector<8x256xf32>, i32 -> vector<8x256xf32>
    %62 = vector.broadcast %43 : vector<1x256xf32> to vector<8x256xf32>
    %63 = arith.mulf %61, %62 : vector<8x256xf32>
    %cst_78 = arith.constant dense<0.000000e+00> : vector<8x256xf32>
    %64 = tpu.matmul %9, %63, %cst_78 {dimension_numbers = #tpu.dot_dimension_numbers<[1], [0], [0], [1], [0, 0, 1, 1], [], []>} : vector<8x8xf32>, vector<8x256xf32>, vector<8x256xf32> -> vector<8x256xf32>
    %65 = arith.addf %60, %64 : vector<8x256xf32>
    %c60_i32 = arith.constant 60 : i32
    %66 = tpu.dynamic_rotate %56 by %c60_i32 dim 1 : vector<8x256xf32>, i32 -> vector<8x256xf32>
    %67 = vector.broadcast %44 : vector<1x256xf32> to vector<8x256xf32>
    %68 = arith.mulf %66, %67 : vector<8x256xf32>
    %cst_79 = arith.constant dense<0.000000e+00> : vector<8x256xf32>
    %69 = tpu.matmul %11, %68, %cst_79 {dimension_numbers = #tpu.dot_dimension_numbers<[1], [0], [0], [1], [0, 0, 1, 1], [], []>} : vector<8x8xf32>, vector<8x256xf32>, vector<8x256xf32> -> vector<8x256xf32>
    %70 = arith.addf %65, %69 : vector<8x256xf32>
    %c4_i32 = arith.constant 4 : i32
    %71 = tpu.dynamic_rotate %56 by %c4_i32 dim 1 : vector<8x256xf32>, i32 -> vector<8x256xf32>
    %72 = vector.broadcast %45 : vector<1x256xf32> to vector<8x256xf32>
    %73 = arith.mulf %71, %72 : vector<8x256xf32>
    %cst_80 = arith.constant dense<0.000000e+00> : vector<8x256xf32>
    %74 = tpu.matmul %13, %73, %cst_80 {dimension_numbers = #tpu.dot_dimension_numbers<[1], [0], [0], [1], [0, 0, 1, 1], [], []>} : vector<8x8xf32>, vector<8x256xf32>, vector<8x256xf32> -> vector<8x256xf32>
    %75 = arith.addf %70, %74 : vector<8x256xf32>
    %cst_81 = arith.constant dense<0.000000e+00> : vector<8x256xf32>
    %76 = tpu.matmul %15, %56, %cst_81 {dimension_numbers = #tpu.dot_dimension_numbers<[1], [0], [0], [1], [0, 0, 1, 1], [], []>} : vector<8x8xf32>, vector<8x256xf32>, vector<8x256xf32> -> vector<8x256xf32>
    %77 = arith.addf %75, %76 : vector<8x256xf32>
    %c252_i32 = arith.constant 252 : i32
    %78 = tpu.dynamic_rotate %56 by %c252_i32 dim 1 : vector<8x256xf32>, i32 -> vector<8x256xf32>
    %79 = vector.broadcast %46 : vector<1x256xf32> to vector<8x256xf32>
    %80 = arith.mulf %78, %79 : vector<8x256xf32>
    %cst_82 = arith.constant dense<0.000000e+00> : vector<8x256xf32>
    %81 = tpu.matmul %17, %80, %cst_82 {dimension_numbers = #tpu.dot_dimension_numbers<[1], [0], [0], [1], [0, 0, 1, 1], [], []>} : vector<8x8xf32>, vector<8x256xf32>, vector<8x256xf32> -> vector<8x256xf32>
    %82 = arith.addf %77, %81 : vector<8x256xf32>
    %c196_i32 = arith.constant 196 : i32
    %83 = tpu.dynamic_rotate %56 by %c196_i32 dim 1 : vector<8x256xf32>, i32 -> vector<8x256xf32>
    %84 = vector.broadcast %47 : vector<1x256xf32> to vector<8x256xf32>
    %85 = arith.mulf %83, %84 : vector<8x256xf32>
    %cst_83 = arith.constant dense<0.000000e+00> : vector<8x256xf32>
    %86 = tpu.matmul %19, %85, %cst_83 {dimension_numbers = #tpu.dot_dimension_numbers<[1], [0], [0], [1], [0, 0, 1, 1], [], []>} : vector<8x8xf32>, vector<8x256xf32>, vector<8x256xf32> -> vector<8x256xf32>
    %87 = arith.addf %82, %86 : vector<8x256xf32>
    %c192_i32 = arith.constant 192 : i32
    %88 = tpu.dynamic_rotate %56 by %c192_i32 dim 1 : vector<8x256xf32>, i32 -> vector<8x256xf32>
    %89 = vector.broadcast %48 : vector<1x256xf32> to vector<8x256xf32>
    %90 = arith.mulf %88, %89 : vector<8x256xf32>
    %cst_84 = arith.constant dense<0.000000e+00> : vector<8x256xf32>
    %91 = tpu.matmul %21, %90, %cst_84 {dimension_numbers = #tpu.dot_dimension_numbers<[1], [0], [0], [1], [0, 0, 1, 1], [], []>} : vector<8x8xf32>, vector<8x256xf32>, vector<8x256xf32> -> vector<8x256xf32>
    %92 = arith.addf %87, %91 : vector<8x256xf32>
    %c188_i32 = arith.constant 188 : i32
    %93 = tpu.dynamic_rotate %56 by %c188_i32 dim 1 : vector<8x256xf32>, i32 -> vector<8x256xf32>
    %94 = vector.broadcast %49 : vector<1x256xf32> to vector<8x256xf32>
    %95 = arith.mulf %93, %94 : vector<8x256xf32>
    %cst_85 = arith.constant dense<0.000000e+00> : vector<8x256xf32>
    %96 = tpu.matmul %23, %95, %cst_85 {dimension_numbers = #tpu.dot_dimension_numbers<[1], [0], [0], [1], [0, 0, 1, 1], [], []>} : vector<8x8xf32>, vector<8x256xf32>, vector<8x256xf32> -> vector<8x256xf32>
    %97 = arith.addf %92, %96 : vector<8x256xf32>
    %98 = vector.broadcast %2 : vector<8x1xf32> to vector<8x256xf32>
    %99 = arith.addf %97, %98 : vector<8x256xf32>
    %cst_86 = arith.constant 0.000000e+00 : f32
    %100 = vector.broadcast %cst_86 : f32 to vector<8x256xf32>
    %101 = arith.maximumf %99, %100 : vector<8x256xf32>
    %c68_i32_87 = arith.constant 68 : i32
    %102 = tpu.dynamic_rotate %101 by %c68_i32_87 dim 1 : vector<8x256xf32>, i32 -> vector<8x256xf32>
    %103 = vector.broadcast %42 : vector<1x256xf32> to vector<8x256xf32>
    %104 = arith.mulf %102, %103 : vector<8x256xf32>
    %cst_88 = arith.constant dense<0.000000e+00> : vector<8x256xf32>
    %105 = tpu.matmul %25, %104, %cst_88 {dimension_numbers = #tpu.dot_dimension_numbers<[1], [0], [0], [1], [0, 0, 1, 1], [], []>} : vector<8x8xf32>, vector<8x256xf32>, vector<8x256xf32> -> vector<8x256xf32>
    %c64_i32_89 = arith.constant 64 : i32
    %106 = tpu.dynamic_rotate %101 by %c64_i32_89 dim 1 : vector<8x256xf32>, i32 -> vector<8x256xf32>
    %107 = vector.broadcast %43 : vector<1x256xf32> to vector<8x256xf32>
    %108 = arith.mulf %106, %107 : vector<8x256xf32>
    %cst_90 = arith.constant dense<0.000000e+00> : vector<8x256xf32>
    %109 = tpu.matmul %27, %108, %cst_90 {dimension_numbers = #tpu.dot_dimension_numbers<[1], [0], [0], [1], [0, 0, 1, 1], [], []>} : vector<8x8xf32>, vector<8x256xf32>, vector<8x256xf32> -> vector<8x256xf32>
    %110 = arith.addf %105, %109 : vector<8x256xf32>
    %c60_i32_91 = arith.constant 60 : i32
    %111 = tpu.dynamic_rotate %101 by %c60_i32_91 dim 1 : vector<8x256xf32>, i32 -> vector<8x256xf32>
    %112 = vector.broadcast %44 : vector<1x256xf32> to vector<8x256xf32>
    %113 = arith.mulf %111, %112 : vector<8x256xf32>
    %cst_92 = arith.constant dense<0.000000e+00> : vector<8x256xf32>
    %114 = tpu.matmul %29, %113, %cst_92 {dimension_numbers = #tpu.dot_dimension_numbers<[1], [0], [0], [1], [0, 0, 1, 1], [], []>} : vector<8x8xf32>, vector<8x256xf32>, vector<8x256xf32> -> vector<8x256xf32>
    %115 = arith.addf %110, %114 : vector<8x256xf32>
    %c4_i32_93 = arith.constant 4 : i32
    %116 = tpu.dynamic_rotate %101 by %c4_i32_93 dim 1 : vector<8x256xf32>, i32 -> vector<8x256xf32>
    %117 = vector.broadcast %45 : vector<1x256xf32> to vector<8x256xf32>
    %118 = arith.mulf %116, %117 : vector<8x256xf32>
    %cst_94 = arith.constant dense<0.000000e+00> : vector<8x256xf32>
    %119 = tpu.matmul %31, %118, %cst_94 {dimension_numbers = #tpu.dot_dimension_numbers<[1], [0], [0], [1], [0, 0, 1, 1], [], []>} : vector<8x8xf32>, vector<8x256xf32>, vector<8x256xf32> -> vector<8x256xf32>
    %120 = arith.addf %115, %119 : vector<8x256xf32>
    %cst_95 = arith.constant dense<0.000000e+00> : vector<8x256xf32>
    %121 = tpu.matmul %33, %101, %cst_95 {dimension_numbers = #tpu.dot_dimension_numbers<[1], [0], [0], [1], [0, 0, 1, 1], [], []>} : vector<8x8xf32>, vector<8x256xf32>, vector<8x256xf32> -> vector<8x256xf32>
    %122 = arith.addf %120, %121 : vector<8x256xf32>
    %c252_i32_96 = arith.constant 252 : i32
    %123 = tpu.dynamic_rotate %101 by %c252_i32_96 dim 1 : vector<8x256xf32>, i32 -> vector<8x256xf32>
    %124 = vector.broadcast %46 : vector<1x256xf32> to vector<8x256xf32>
    %125 = arith.mulf %123, %124 : vector<8x256xf32>
    %cst_97 = arith.constant dense<0.000000e+00> : vector<8x256xf32>
    %126 = tpu.matmul %35, %125, %cst_97 {dimension_numbers = #tpu.dot_dimension_numbers<[1], [0], [0], [1], [0, 0, 1, 1], [], []>} : vector<8x8xf32>, vector<8x256xf32>, vector<8x256xf32> -> vector<8x256xf32>
    %127 = arith.addf %122, %126 : vector<8x256xf32>
    %c196_i32_98 = arith.constant 196 : i32
    %128 = tpu.dynamic_rotate %101 by %c196_i32_98 dim 1 : vector<8x256xf32>, i32 -> vector<8x256xf32>
    %129 = vector.broadcast %47 : vector<1x256xf32> to vector<8x256xf32>
    %130 = arith.mulf %128, %129 : vector<8x256xf32>
    %cst_99 = arith.constant dense<0.000000e+00> : vector<8x256xf32>
    %131 = tpu.matmul %37, %130, %cst_99 {dimension_numbers = #tpu.dot_dimension_numbers<[1], [0], [0], [1], [0, 0, 1, 1], [], []>} : vector<8x8xf32>, vector<8x256xf32>, vector<8x256xf32> -> vector<8x256xf32>
    %132 = arith.addf %127, %131 : vector<8x256xf32>
    %c192_i32_100 = arith.constant 192 : i32
    %133 = tpu.dynamic_rotate %101 by %c192_i32_100 dim 1 : vector<8x256xf32>, i32 -> vector<8x256xf32>
    %134 = vector.broadcast %48 : vector<1x256xf32> to vector<8x256xf32>
    %135 = arith.mulf %133, %134 : vector<8x256xf32>
    %cst_101 = arith.constant dense<0.000000e+00> : vector<8x256xf32>
    %136 = tpu.matmul %39, %135, %cst_101 {dimension_numbers = #tpu.dot_dimension_numbers<[1], [0], [0], [1], [0, 0, 1, 1], [], []>} : vector<8x8xf32>, vector<8x256xf32>, vector<8x256xf32> -> vector<8x256xf32>
    %137 = arith.addf %132, %136 : vector<8x256xf32>
    %c188_i32_102 = arith.constant 188 : i32
    %138 = tpu.dynamic_rotate %101 by %c188_i32_102 dim 1 : vector<8x256xf32>, i32 -> vector<8x256xf32>
    %139 = vector.broadcast %49 : vector<1x256xf32> to vector<8x256xf32>
    %140 = arith.mulf %138, %139 : vector<8x256xf32>
    %cst_103 = arith.constant dense<0.000000e+00> : vector<8x256xf32>
    %141 = tpu.matmul %41, %140, %cst_103 {dimension_numbers = #tpu.dot_dimension_numbers<[1], [0], [0], [1], [0, 0, 1, 1], [], []>} : vector<8x8xf32>, vector<8x256xf32>, vector<8x256xf32> -> vector<8x256xf32>
    %142 = arith.addf %137, %141 : vector<8x256xf32>
    %143 = vector.broadcast %3 : vector<8x1xf32> to vector<8x256xf32>
    %144 = arith.addf %142, %143 : vector<8x256xf32>
    %cst_104 = arith.constant 0.000000e+00 : f32
    %145 = vector.broadcast %cst_104 : f32 to vector<8x256xf32>
    %146 = arith.maximumf %144, %145 : vector<8x256xf32>
    %cst_105 = arith.constant dense<0.000000e+00> : vector<1x256xf32>
    %147 = tpu.matmul %4, %146, %cst_105 {dimension_numbers = #tpu.dot_dimension_numbers<[1], [0], [0], [1], [0, 0, 1, 1], [], []>} : vector<1x8xf32>, vector<8x256xf32>, vector<1x256xf32> -> vector<1x256xf32>
    %148 = vector.broadcast %5 : vector<1x1xf32> to vector<1x256xf32>
    %149 = arith.addf %147, %148 : vector<1x256xf32>
    %c0_106 = arith.constant 0 : index
    %c0_107 = arith.constant 0 : index
    %c0_108 = arith.constant 0 : index
    %150 = vector.load %arg11[%c0_106, %c0_107, %c0_108] : memref<1x1x256xf32, #tpu.memory_space<vmem>>, vector<1x1x256xf32>
    %151 = vector.shape_cast %150 : vector<1x1x256xf32> to vector<1x256xf32>
    %152 = vector.shape_cast %149 : vector<1x256xf32> to vector<1x1x256xf32>
    tpu.vector_store %arg11[%c0_106, %c0_107, %c0_108], %152 {strides = array<i32>} : memref<1x1x256xf32, #tpu.memory_space<vmem>>, vector<1x1x256xf32>,
    return
  }
  func.func @transform_0(%arg0: i32) -> (i32, i32, i32) {
    %c0_i32 = arith.constant 0 : i32
    %c0_i32_0 = arith.constant 0 : i32
    %c0_i32_1 = arith.constant 0 : i32
    return %arg0, %c0_i32, %c0_i32_0 : i32, i32, i32
  }
  func.func @transform_1(%arg0: i32) -> (i32, i32) {
    %c0_i32 = arith.constant 0 : i32
    %c0_i32_0 = arith.constant 0 : i32
    %c0_i32_1 = arith.constant 0 : i32
    return %c0_i32, %c0_i32_0 : i32, i32
  }
  func.func @transform_2(%arg0: i32) -> (i32, i32) {
    %c0_i32 = arith.constant 0 : i32
    %c0_i32_0 = arith.constant 0 : i32
    %c0_i32_1 = arith.constant 0 : i32
    return %c0_i32, %c0_i32_0 : i32, i32
  }
  func.func @transform_3(%arg0: i32) -> (i32, i32, i32) {
    %c0_i32 = arith.constant 0 : i32
    %c0_i32_0 = arith.constant 0 : i32
    %c0_i32_1 = arith.constant 0 : i32
    %c0_i32_2 = arith.constant 0 : i32
    return %c0_i32, %c0_i32_0, %c0_i32_1 : i32, i32, i32
  }
  func.func @transform_4(%arg0: i32) -> (i32, i32) {
    %c0_i32 = arith.constant 0 : i32
    %c0_i32_0 = arith.constant 0 : i32
    %c0_i32_1 = arith.constant 0 : i32
    return %c0_i32, %c0_i32_0 : i32, i32
  }
  func.func @transform_5(%arg0: i32) -> (i32, i32, i32) {
    %c0_i32 = arith.constant 0 : i32
    %c0_i32_0 = arith.constant 0 : i32
    %c0_i32_1 = arith.constant 0 : i32
    %c0_i32_2 = arith.constant 0 : i32
    return %c0_i32, %c0_i32_0, %c0_i32_1 : i32, i32, i32
  }
  func.func @transform_6(%arg0: i32) -> (i32, i32) {
    %c0_i32 = arith.constant 0 : i32
    %c0_i32_0 = arith.constant 0 : i32
    %c0_i32_1 = arith.constant 0 : i32
    return %c0_i32, %c0_i32_0 : i32, i32
  }
  func.func @transform_7(%arg0: i32) -> (i32, i32) {
    %c0_i32 = arith.constant 0 : i32
    %c0_i32_0 = arith.constant 0 : i32
    %c0_i32_1 = arith.constant 0 : i32
    return %c0_i32, %c0_i32_0 : i32, i32
  }
  func.func @transform_8(%arg0: i32) -> (i32, i32) {
    %c0_i32 = arith.constant 0 : i32
    %c0_i32_0 = arith.constant 0 : i32
    %c0_i32_1 = arith.constant 0 : i32
    return %c0_i32, %c0_i32_0 : i32, i32
  }
  func.func @transform_9(%arg0: i32) -> (i32, i32) {
    %c0_i32 = arith.constant 0 : i32
    %c0_i32_0 = arith.constant 0 : i32
    %c0_i32_1 = arith.constant 0 : i32
    return %c0_i32, %c0_i32_0 : i32, i32
  }
  func.func @transform_10(%arg0: i32) -> (i32, i32, i32) {
    %c0_i32 = arith.constant 0 : i32
    %c0_i32_0 = arith.constant 0 : i32
    %c0_i32_1 = arith.constant 0 : i32
    return %arg0, %c0_i32, %c0_i32_0 : i32, i32, i32
  }
}

</mosaic_0001>

<llo_original>
// kernel: tpu_custom_call.1
$region0: #{tpu_custom_call.1}
  #allocation0 [shape = 'u32[]', space=smem, size = 0x4, offset = 0x4, fixed_abs, tag = 'smem constant byte address 0x4 - core index']
  #allocation1 [shape = 'u32[144,128]{1,0:T(1,128)}', space=vmem, size = 0x12000, scoped, tag = 'internal scratch']
  #allocation2 [shape = 'f32[1,1]{1,0:T(1,128)S(1)}', space=vmem, size = 0x200, scoped, tag = 'scoped memory for tpu_custom_call.1']
  %s0 = inlined_call_operand.vmem [shape: f32[2,64,256], index: 0, kind: input, shape index: {}]
  %s1 = inlined_call_operand.hbm [shape: f32[8,64], index: 1, kind: input, shape index: {}]
  %s2 = inlined_call_operand.vmem [shape: f32[8,1], index: 2, kind: input, shape index: {}]
  %s3 = inlined_call_operand.vmem [shape: f32[9,8,8], index: 3, kind: input, shape index: {}]
  %s4 = inlined_call_operand.vmem [shape: f32[8,1], index: 4, kind: input, shape index: {}]
  %s5 = inlined_call_operand.vmem [shape: f32[9,8,8], index: 5, kind: input, shape index: {}]
  %s6 = inlined_call_operand.vmem [shape: f32[8,1], index: 6, kind: input, shape index: {}]
  %s7 = inlined_call_operand.vmem [shape: f32[1,8], index: 7, kind: input, shape index: {}]
  %s8 = inlined_call_operand.<no memory space> [shape: f32[1,1], index: 8, kind: input, shape index: {}]
  %s9 = inlined_call_operand.hbm [shape: f32[9,256], index: 9, kind: input, shape index: {}]
  %s10 = inlined_call_operand.hbm [shape: f32[2,1,256], index: 10, kind: output, shape index: {}]
  %s11 = sld [smem:[#allocation0]]
  $region81: #{tpu_custom_call.1} parent=0
    _
  %s13 = ssub.s32 1, %s11
  %s14 = scalar_select 0, %s13, %s11
  %v15 = vstv %s8
  %16 = vst [vmem:[#allocation2] sm:$0x1] %v15
  $region1: #{tpu_custom_call.1} parent=0
    #allocation3 [shape = 'u8[4096]{0}', space=vmem, size = 0x1000, scoped, tag = 'input window, operand 1, single buffered']
    #allocation4 [shape = 's32[2]{0}', space=sflag, size = 0x8, scoped, tag = 'scoped memory for tpu_custom_call.1']
    #allocation5 [shape = 's32[2]{0}', space=sflag, size = 0x8, scoped, tag = 'scoped memory for tpu_custom_call.1']
    #allocation6 [shape = 'u8[16384]{0}', space=vmem, size = 0x4000, scoped, tag = 'input window, operand 9, single buffered']
    #allocation7 [shape = 's32[1]{0}', space=sflag, size = 0x4, scoped, tag = 'scoped memory for tpu_custom_call.1']
    #allocation8 [shape = 'u8[2048]{0}', space=vmem, size = 0x800, scoped, tag = 'output window, operand 0']
    %17 = vsyncpa [#allocation4], 0
    %18 = vsyncpa [#allocation7], 0
    %19 = vsyncpa [#allocation5], 0
    %s20 = scalar_lea.sflag [#allocation5], 1
    %21 = vsyncpa %s20, 0
    loop: start=0, step=1, limit=4
    $region2: #{tpu_custom_call.1} parent=1 // loop_pre_header
      _
    $region3: #{tpu_custom_call.1} parent=1 // loop_header
      %s23 = sphi 0, %s27
      %p24 = scmp.ge.s32.totalorder %s23, 4
      %s33 = sphi 0, %s35
      %s36 = sphi 0, %s33
      %s37 = sphi 0, %s36
      %s53 = sphi 0, %s37
      %s57 = sphi 0, %s57
      %s59 = sphi 0, %s57
      %s60 = sphi 0, %s59
      %s74 = sphi 0, %s60
      %s78 = sphi 0, %s78
      %s80 = sphi 0, %s78
      %s81 = sphi 0, %s80
      %s95 = sphi 0, %s81
      %s99 = sphi 0, %s99
      %s101 = sphi 0, %s99
      %s102 = sphi 0, %s101
      %s116 = sphi 0, %s102
      %s120 = sphi 0, %s120
      %s122 = sphi 0, %s120
      %s123 = sphi 0, %s122
      %s137 = sphi 0, %s123
      %s141 = sphi 0, %s141
      %s143 = sphi 0, %s141
      %s144 = sphi 0, %s143
      %s158 = sphi 0, %s144
      %s162 = sphi 0, %s162
      %s164 = sphi 0, %s162
      %s165 = sphi 0, %s164
      %s179 = sphi 0, %s165
      %s183 = sphi 0, %s183
      %s185 = sphi 0, %s183
      %s186 = sphi 0, %s185
      %s200 = sphi 0, %s186
      %s204 = sphi 0, %s204
      %s206 = sphi 0, %s204
      %s207 = sphi 0, %s206
      %s221 = sphi 0, %s207
      %s225 = sphi 0, %s225
      %s227 = sphi 0, %s225
      %s228 = sphi 0, %s227
      %s242 = sphi 0, %s228
      %s248 = sphi 0, %s250
      %s251 = sphi 0, %s248
      %s252 = sphi 0, %s251
      %s268 = sphi 0, %s252
    $region4: #{tpu_custom_call.1} parent=1 // loop_header_branch
      %26 = sbr.rel (%p24) target = $region8
    $region5: #{tpu_custom_call.1} parent=1 // loop_body
      %s28 = ssub.s32 %s23, 1
      %s29 = ssub.s32 %s23, 2
      %s30 = sadd.s32 %s23, 1
      %s31 = ssub.s32 %s23, %s30
      %p32 = scmp.eq.s32.totalorder %s31, 0
      %s34 = sadd.s32 %s33, 1
      %s35 = scalar_select %p32, %s33, %s34
      %p38 = pneg %p32
      %p39 = scmp.eq.s32.totalorder %s23, 1
      %p40 = por %p38, %p39
      %p41 = scmp.ne.s32.totalorder %s33, %s36
      %p42 = scmp.eq.s32.totalorder %s23, 0
      %p43 = por %p41, %p42
      %p44 = scmp.ne.s32.totalorder %s33, %s36
      %p45 = scmp.eq.s32.totalorder %s28, 1
      %p46 = por %p44, %p45
      %p47 = scmp.ne.s32.totalorder %s36, %s37
      %p48 = scmp.eq.s32.totalorder %s28, 0
      %p49 = por %p47, %p48
      %p50 = scmp.ne.s32.totalorder %s36, %s37
      %p51 = scmp.eq.s32.totalorder %s29, 1
      %p52 = por %p50, %p51
      %p54 = scmp.ne.s32.totalorder %s37, %s53
      %p55 = scmp.eq.s32.totalorder %s29, 0
      %p56 = por %p54, %p55
      %s58 = sadd.s32 %s57, 1
      %p61 = scmp.eq.s32.totalorder %s23, 1
      %p62 = scmp.ne.s32.totalorder %s57, %s59
      %p63 = scmp.eq.s32.totalorder %s23, 0
      %p64 = por %p62, %p63
      %p65 = scmp.ne.s32.totalorder %s57, %s59
      %p66 = scmp.eq.s32.totalorder %s28, 1
      %p67 = por %p65, %p66
      %p68 = scmp.ne.s32.totalorder %s59, %s60
      %p69 = scmp.eq.s32.totalorder %s28, 0
      %p70 = por %p68, %p69
      %p71 = scmp.ne.s32.totalorder %s59, %s60
      %p72 = scmp.eq.s32.totalorder %s29, 1
      %p73 = por %p71, %p72
      %p75 = scmp.ne.s32.totalorder %s60, %s74
      %p76 = scmp.eq.s32.totalorder %s29, 0
      %p77 = por %p75, %p76
      %s79 = sadd.s32 %s78, 1
      %p82 = scmp.eq.s32.totalorder %s23, 1
      %p83 = scmp.ne.s32.totalorder %s78, %s80
      %p84 = scmp.eq.s32.totalorder %s23, 0
      %p85 = por %p83, %p84
      %p86 = scmp.ne.s32.totalorder %s78, %s80
      %p87 = scmp.eq.s32.totalorder %s28, 1
      %p88 = por %p86, %p87
      %p89 = scmp.ne.s32.totalorder %s80, %s81
      %p90 = scmp.eq.s32.totalorder %s28, 0
      %p91 = por %p89, %p90
      %p92 = scmp.ne.s32.totalorder %s80, %s81
      %p93 = scmp.eq.s32.totalorder %s29, 1
      %p94 = por %p92, %p93
      %p96 = scmp.ne.s32.totalorder %s81, %s95
      %p97 = scmp.eq.s32.totalorder %s29, 0
      %p98 = por %p96, %p97
      %s100 = sadd.s32 %s99, 1
      %p103 = scmp.eq.s32.totalorder %s23, 1
      %p104 = scmp.ne.s32.totalorder %s99, %s101
      %p105 = scmp.eq.s32.totalorder %s23, 0
      %p106 = por %p104, %p105
      %p107 = scmp.ne.s32.totalorder %s99, %s101
      %p108 = scmp.eq.s32.totalorder %s28, 1
      %p109 = por %p107, %p108
      %p110 = scmp.ne.s32.totalorder %s101, %s102
      %p111 = scmp.eq.s32.totalorder %s28, 0
      %p112 = por %p110, %p111
      %p113 = scmp.ne.s32.totalorder %s101, %s102
      %p114 = scmp.eq.s32.totalorder %s29, 1
      %p115 = por %p113, %p114
      %p117 = scmp.ne.s32.totalorder %s102, %s116
      %p118 = scmp.eq.s32.totalorder %s29, 0
      %p119 = por %p117, %p118
      %s121 = sadd.s32 %s120, 1
      %p124 = scmp.eq.s32.totalorder %s23, 1
      %p125 = scmp.ne.s32.totalorder %s120, %s122
      %p126 = scmp.eq.s32.totalorder %s23, 0
      %p127 = por %p125, %p126
      %p128 = scmp.ne.s32.totalorder %s120, %s122
      %p129 = scmp.eq.s32.totalorder %s28, 1
      %p130 = por %p128, %p129
      %p131 = scmp.ne.s32.totalorder %s122, %s123
      %p132 = scmp.eq.s32.totalorder %s28, 0
      %p133 = por %p131, %p132
      %p134 = scmp.ne.s32.totalorder %s122, %s123
      %p135 = scmp.eq.s32.totalorder %s29, 1
      %p136 = por %p134, %p135
      %p138 = scmp.ne.s32.totalorder %s123, %s137
      %p139 = scmp.eq.s32.totalorder %s29, 0
      %p140 = por %p138, %p139
      %s142 = sadd.s32 %s141, 1
      %p145 = scmp.eq.s32.totalorder %s23, 1
      %p146 = scmp.ne.s32.totalorder %s141, %s143
      %p147 = scmp.eq.s32.totalorder %s23, 0
      %p148 = por %p146, %p147
      %p149 = scmp.ne.s32.totalorder %s141, %s143
      %p150 = scmp.eq.s32.totalorder %s28, 1
      %p151 = por %p149, %p150
      %p152 = scmp.ne.s32.totalorder %s143, %s144
      %p153 = scmp.eq.s32.totalorder %s28, 0
      %p154 = por %p152, %p153
      %p155 = scmp.ne.s32.totalorder %s143, %s144
      %p156 = scmp.eq.s32.totalorder %s29, 1
      %p157 = por %p155, %p156
      %p159 = scmp.ne.s32.totalorder %s144, %s158
      %p160 = scmp.eq.s32.totalorder %s29, 0
      %p161 = por %p159, %p160
      %s163 = sadd.s32 %s162, 1
      %p166 = scmp.eq.s32.totalorder %s23, 1
      %p167 = scmp.ne.s32.totalorder %s162, %s164
      %p168 = scmp.eq.s32.totalorder %s23, 0
      %p169 = por %p167, %p168
      %p170 = scmp.ne.s32.totalorder %s162, %s164
      %p171 = scmp.eq.s32.totalorder %s28, 1
      %p172 = por %p170, %p171
      %p173 = scmp.ne.s32.totalorder %s164, %s165
      %p174 = scmp.eq.s32.totalorder %s28, 0
      %p175 = por %p173, %p174
      %p176 = scmp.ne.s32.totalorder %s164, %s165
      %p177 = scmp.eq.s32.totalorder %s29, 1
      %p178 = por %p176, %p177
      %p180 = scmp.ne.s32.totalorder %s165, %s179
      %p181 = scmp.eq.s32.totalorder %s29, 0
      %p182 = por %p180, %p181
      %s184 = sadd.s32 %s183, 1
      %p187 = scmp.eq.s32.totalorder %s23, 1
      %p188 = scmp.ne.s32.totalorder %s183, %s185
      %p189 = scmp.eq.s32.totalorder %s23, 0
      %p190 = por %p188, %p189
      %p191 = scmp.ne.s32.totalorder %s183, %s185
      %p192 = scmp.eq.s32.totalorder %s28, 1
      %p193 = por %p191, %p192
      %p194 = scmp.ne.s32.totalorder %s185, %s186
      %p195 = scmp.eq.s32.totalorder %s28, 0
      %p196 = por %p194, %p195
      %p197 = scmp.ne.s32.totalorder %s185, %s186
      %p198 = scmp.eq.s32.totalorder %s29, 1
      %p199 = por %p197, %p198
      %p201 = scmp.ne.s32.totalorder %s186, %s200
      %p202 = scmp.eq.s32.totalorder %s29, 0
      %p203 = por %p201, %p202
      %s205 = sadd.s32 %s204, 1
      %p208 = scmp.eq.s32.totalorder %s23, 1
      %p209 = scmp.ne.s32.totalorder %s204, %s206
      %p210 = scmp.eq.s32.totalorder %s23, 0
      %p211 = por %p209, %p210
      %p212 = scmp.ne.s32.totalorder %s204, %s206
      %p213 = scmp.eq.s32.totalorder %s28, 1
      %p214 = por %p212, %p213
      %p215 = scmp.ne.s32.totalorder %s206, %s207
      %p216 = scmp.eq.s32.totalorder %s28, 0
      %p217 = por %p215, %p216
      %p218 = scmp.ne.s32.totalorder %s206, %s207
      %p219 = scmp.eq.s32.totalorder %s29, 1
      %p220 = por %p218, %p219
      %p222 = scmp.ne.s32.totalorder %s207, %s221
      %p223 = scmp.eq.s32.totalorder %s29, 0
      %p224 = por %p222, %p223
      %s226 = sadd.s32 %s225, 1
      %p229 = scmp.eq.s32.totalorder %s23, 1
      %p230 = scmp.ne.s32.totalorder %s225, %s227
      %p231 = scmp.eq.s32.totalorder %s23, 0
      %p232 = por %p230, %p231
      %p233 = scmp.ne.s32.totalorder %s225, %s227
      %p234 = scmp.eq.s32.totalorder %s28, 1
      %p235 = por %p233, %p234
      %p236 = scmp.ne.s32.totalorder %s227, %s228
      %p237 = scmp.eq.s32.totalorder %s28, 0
      %p238 = por %p236, %p237
      %p239 = scmp.ne.s32.totalorder %s227, %s228
      %p240 = scmp.eq.s32.totalorder %s29, 1
      %p241 = por %p239, %p240
      %p243 = scmp.ne.s32.totalorder %s228, %s242
      %p244 = scmp.eq.s32.totalorder %s29, 0
      %p245 = por %p243, %p244
      %s246 = ssub.s32 %s23, %s30
      %p247 = scmp.eq.s32.totalorder %s246, 0
      %s249 = sadd.s32 %s248, 1
      %s250 = scalar_select %p247, %s248, %s249
      %p253 = pneg %p247
      %p254 = scmp.eq.s32.totalorder %s23, 1
      %p255 = por %p253, %p254
      %p256 = scmp.ne.s32.totalorder %s248, %s251
      %p257 = scmp.eq.s32.totalorder %s23, 0
      %p258 = por %p256, %p257
      %p259 = scmp.ne.s32.totalorder %s248, %s251
      %p260 = scmp.eq.s32.totalorder %s28, 1
      %p261 = por %p259, %p260
      %p262 = scmp.ne.s32.totalorder %s251, %s252
      %p263 = scmp.eq.s32.totalorder %s28, 0
      %p264 = por %p262, %p263
      %p265 = scmp.ne.s32.totalorder %s251, %s252
      %p266 = scmp.eq.s32.totalorder %s29, 1
      %p267 = por %p265, %p266
      %p269 = scmp.ne.s32.totalorder %s252, %s268
      %p270 = scmp.eq.s32.totalorder %s29, 0
      %p271 = por %p269, %p270
      %p272 = scmp.le.s32.totalorder 1, %s23
      %p273 = scmp.lt.s32.totalorder %s23, 3
      %p274 = pnand %p272, %p273
      %p275 = pneg %p274
      // Predicated region
      $region9: #{tpu_custom_call.1} parent=5 // pred_check
        _
      $region10: #{tpu_custom_call.1} parent=5 // pred_check_branch
        %277 = sbr.rel (%p274) target = $region12
      $region11: #{tpu_custom_call.1} parent=5 // pred_region
        %s278 = ssub.s32 %s23, 1
        // Predicated region
        $region13: #{tpu_custom_call.1} parent=11 // pred_check
          %p279 = pneg %p70
        $region14: #{tpu_custom_call.1} parent=11 // pred_check_branch
          %281 = sbr.rel (%p279) target = $region16
        $region15: #{tpu_custom_call.1} parent=11 // pred_region
          %s283 = ssub.s32 128, 128
          %284 = vsyncadd [#allocation4], %s283
          %s286 = sshll.u32 [#allocation3], 4
          %s287 = int_to_ptr.vmem [resolvable:$true] %s286
          %289 = dma.hbm_to_vmem [thread:$0]  %s1, 128, %s287, [#allocation4]
        $region16: #{tpu_custom_call.1} parent=11 // pred_fallthru
          _
        // Predicated region
        $region17: #{tpu_custom_call.1} parent=11 // pred_check
          %p290 = pneg %p91
        $region18: #{tpu_custom_call.1} parent=11 // pred_check_branch
          %292 = sbr.rel (%p290) target = $region20
        $region19: #{tpu_custom_call.1} parent=11 // pred_region
          _
        $region20: #{tpu_custom_call.1} parent=11 // pred_fallthru
          _
        // Predicated region
        $region21: #{tpu_custom_call.1} parent=11 // pred_check
          %p293 = pneg %p112
        $region22: #{tpu_custom_call.1} parent=11 // pred_check_branch
          %295 = sbr.rel (%p293) target = $region24
        $region23: #{tpu_custom_call.1} parent=11 // pred_region
          _
        $region24: #{tpu_custom_call.1} parent=11 // pred_fallthru
          _
        // Predicated region
        $region25: #{tpu_custom_call.1} parent=11 // pred_check
          %p296 = pneg %p133
        $region26: #{tpu_custom_call.1} parent=11 // pred_check_branch
          %298 = sbr.rel (%p296) target = $region28
        $region27: #{tpu_custom_call.1} parent=11 // pred_region
          _
        $region28: #{tpu_custom_call.1} parent=11 // pred_fallthru
          _
        // Predicated region
        $region29: #{tpu_custom_call.1} parent=11 // pred_check
          %p299 = pneg %p154
        $region30: #{tpu_custom_call.1} parent=11 // pred_check_branch
          %301 = sbr.rel (%p299) target = $region32
        $region31: #{tpu_custom_call.1} parent=11 // pred_region
          _
        $region32: #{tpu_custom_call.1} parent=11 // pred_fallthru
          _
        // Predicated region
        $region33: #{tpu_custom_call.1} parent=11 // pred_check
          %p302 = pneg %p175
        $region34: #{tpu_custom_call.1} parent=11 // pred_check_branch
          %304 = sbr.rel (%p302) target = $region36
        $region35: #{tpu_custom_call.1} parent=11 // pred_region
          _
        $region36: #{tpu_custom_call.1} parent=11 // pred_fallthru
          _
        // Predicated region
        $region37: #{tpu_custom_call.1} parent=11 // pred_check
          %p305 = pneg %p196
        $region38: #{tpu_custom_call.1} parent=11 // pred_check_branch
          %307 = sbr.rel (%p305) target = $region40
        $region39: #{tpu_custom_call.1} parent=11 // pred_region
          _
        $region40: #{tpu_custom_call.1} parent=11 // pred_fallthru
          _
        // Predicated region
        $region41: #{tpu_custom_call.1} parent=11 // pred_check
          %p308 = pneg %p217
        $region42: #{tpu_custom_call.1} parent=11 // pred_check_branch
          %310 = sbr.rel (%p308) target = $region44
        $region43: #{tpu_custom_call.1} parent=11 // pred_region
          _
        $region44: #{tpu_custom_call.1} parent=11 // pred_fallthru
          _
        // Predicated region
        $region45: #{tpu_custom_call.1} parent=11 // pred_check
          %p311 = pneg %p238
        $region46: #{tpu_custom_call.1} parent=11 // pred_check_branch
          %313 = sbr.rel (%p311) target = $region48
        $region47: #{tpu_custom_call.1} parent=11 // pred_region
          %s315 = ssub.s32 512, 512
          %316 = vsyncadd [#allocation7], %s315
          %s317 = sshll.u32 [#allocation6], 4
          %s318 = int_to_ptr.vmem [resolvable:$true] %s317
          %323 = dma.hbm_to_vmem [thread:$0]  %s9, 512, %s318, [#allocation7], 256, 256, 16
        $region48: #{tpu_custom_call.1} parent=11 // pred_fallthru
          _
      $region12: #{tpu_custom_call.1} parent=5 // pred_fallthru
        _
      %p324 = scmp.lt.s32.totalorder %s23, 2
      // Predicated region
      $region49: #{tpu_custom_call.1} parent=5 // pred_check
        %p325 = pneg %p324
      $region50: #{tpu_custom_call.1} parent=5 // pred_check_branch
        %327 = sbr.rel (%p325) target = $region52
      $region51: #{tpu_custom_call.1} parent=5 // pred_region
        // Predicated region
        $region53: #{tpu_custom_call.1} parent=51 // pred_check
          %p328 = pneg %p43
        $region54: #{tpu_custom_call.1} parent=51 // pred_check_branch
          %330 = sbr.rel (%p328) target = $region56
        $region55: #{tpu_custom_call.1} parent=51 // pred_region
          %p331 = scmp.lt.s32.totalorder %s23, 1
          %s332 = scalar_select %p331, %s23, 1
          %s333 = smul.addr %s332, 16
          %s334 = smul.addr %s333, 8
          %s335 = scalar_lea.vmem %s0, %s334
        $region56: #{tpu_custom_call.1} parent=51 // pred_fallthru
          _
      $region52: #{tpu_custom_call.1} parent=5 // pred_fallthru
        _
      %p336 = scmp.le.s32.totalorder 1, %s23
      %p337 = scmp.lt.s32.totalorder %s23, 3
      %p338 = pnand %p336, %p337
      %p339 = pneg %p338
      // Predicated region
      $region57: #{tpu_custom_call.1} parent=5 // pred_check
        _
      $region58: #{tpu_custom_call.1} parent=5 // pred_check_branch
        %341 = sbr.rel (%p338) target = $region60
      $region59: #{tpu_custom_call.1} parent=5 // pred_region
        %s342 = ssub.s32 %s23, 1
        // Predicated region
        $region61: #{tpu_custom_call.1} parent=59 // pred_check
          %p343 = pneg %p70
        $region62: #{tpu_custom_call.1} parent=59 // pred_check_branch
          %345 = sbr.rel (%p343) target = $region64
        $region63: #{tpu_custom_call.1} parent=59 // pred_region
          %346 = dma.done [#allocation4], 128
        $region64: #{tpu_custom_call.1} parent=59 // pred_fallthru
          _
        // Predicated region
        $region65: #{tpu_custom_call.1} parent=59 // pred_check
          %p347 = pneg %p238
        $region66: #{tpu_custom_call.1} parent=59 // pred_check_branch
          %349 = sbr.rel (%p347) target = $region68
        $region67: #{tpu_custom_call.1} parent=59 // pred_region
          %350 = dma.done [#allocation7], 512
        $region68: #{tpu_custom_call.1} parent=59 // pred_fallthru
          _
        %p351 = scmp.lt.s32.totalorder %s28, 1
        %s352 = scalar_select %p351, %s28, 1
        %s353 = smul.addr %s352, 16
        %s354 = smul.addr %s353, 8
        %s355 = scalar_lea.vmem %s0, %s354
        %p356 = pneg %p49
        %p357 = pneg %p46
        %p358 = pneg %p70
        %p359 = pneg %p67
        %p360 = pneg %p91
        %p361 = pneg %p88
        %p362 = pneg %p112
        %p363 = pneg %p109
        %p364 = pneg %p133
        %p365 = pneg %p130
        %p366 = pneg %p154
        %p367 = pneg %p151
        %p368 = pneg %p175
        %p369 = pneg %p172
        %p370 = pneg %p196
        %p371 = pneg %p193
        %p372 = pneg %p217
        %p373 = pneg %p214
        %p374 = pneg %p238
        %p375 = pneg %p235
        %p376 = pneg %p264
        %p377 = pneg %p261
        %s378 = sand.u32 %s251, 1
        %s379 = scalar_lea.sflag [#allocation5], %s378
        %s380 = sand.u32 %s251, 1
        %s381 = smul.addr %s380, 2
        %s382 = scalar_lea.vmem [#allocation8], %s381
        %p383 = scmp.lt.s32.totalorder %s28, 1
        %s384 = scalar_select %p383, %s28, 1
        %s385 = smul.addr %s384, 16
        %s386 = smul.addr %s385, 8
        %s387 = scalar_lea.vmem %s0, %s386
        %v388 = vld [vmem:[#allocation3] sm:$0xff]
        %v389 = vld [vmem:[%s2] sm:$0xff]
        %v390 = vld [vmem:[%s4] sm:$0xff]
        %v391 = vld [vmem:[%s6] sm:$0xff]
        %v392 = vld [vmem:[%s7] sm:$0x1]
        %v393 = vld [vmem:[#allocation2] sm:$0x1]
        %v394 = vld [vmem:[%s3] sm:$0xff]
        %s395 = scalar_lea.vmem %s3, 8
        %v396 = vld [vmem:[%s395] sm:$0xff]
        %s397 = scalar_lea.vmem %s3, 16
        %v398 = vld [vmem:[%s397] sm:$0xff]
        %s399 = scalar_lea.vmem %s3, 24
        %v400 = vld [vmem:[%s399] sm:$0xff]
        %s401 = scalar_lea.vmem %s3, 32
        %v402 = vld [vmem:[%s401] sm:$0xff]
        %s403 = scalar_lea.vmem %s3, 40
        %v404 = vld [vmem:[%s403] sm:$0xff]
        %s405 = scalar_lea.vmem %s3, 48
        %v406 = vld [vmem:[%s405] sm:$0xff]
        %s407 = scalar_lea.vmem %s3, 56
        %v408 = vld [vmem:[%s407] sm:$0xff]
        %s409 = scalar_lea.vmem %s3, 64
        %v410 = vld [vmem:[%s409] sm:$0xff]
        %v411 = vld [vmem:[%s5] sm:$0xff]
        %s412 = scalar_lea.vmem %s5, 8
        %v413 = vld [vmem:[%s412] sm:$0xff]
        %s414 = scalar_lea.vmem %s5, 16
        %v415 = vld [vmem:[%s414] sm:$0xff]
        %s416 = scalar_lea.vmem %s5, 24
        %v417 = vld [vmem:[%s416] sm:$0xff]
        %s418 = scalar_lea.vmem %s5, 32
        %v419 = vld [vmem:[%s418] sm:$0xff]
        %s420 = scalar_lea.vmem %s5, 40
        %v421 = vld [vmem:[%s420] sm:$0xff]
        %s422 = scalar_lea.vmem %s5, 48
        %v423 = vld [vmem:[%s422] sm:$0xff]
        %s424 = scalar_lea.vmem %s5, 56
        %v425 = vld [vmem:[%s424] sm:$0xff]
        %s426 = scalar_lea.vmem %s5, 64
        %v427 = vld [vmem:[%s426] sm:$0xff]
        %v428 = vld [vmem:[#allocation6] ss:$8 sm:$0x3]
        %s429 = scalar_lea.vmem [#allocation6], 1
        %v430 = vld [vmem:[%s429] ss:$8 sm:$0x3]
        %s431 = scalar_lea.vmem [#allocation6], 2
        %v432 = vld [vmem:[%s431] ss:$8 sm:$0x3]
        %s433 = scalar_lea.vmem [#allocation6], 3
        %v434 = vld [vmem:[%s433] ss:$8 sm:$0x3]
        %s435 = scalar_lea.vmem [#allocation6], 5
        %v436 = vld [vmem:[%s435] ss:$8 sm:$0x3]
        %s437 = scalar_lea.vmem [#allocation6], 6
        %v438 = vld [vmem:[%s437] ss:$8 sm:$0x3]
        %s439 = scalar_lea.vmem [#allocation6], 7
        %v440 = vld [vmem:[%s439] ss:$8 sm:$0x3]
        %s441 = scalar_lea.vmem [#allocation6], 16
        %v442 = vld [vmem:[%s441] ss:$8 sm:$0x3]
        %v443 = vld [vmem:[%s387] sm:$0xff]
        %v444 = vld [vmem:[%s387 + $0x8] sm:$0xff]
        %v445 = vld [vmem:[%s387 + $0x10] sm:$0xff]
        %v446 = vld [vmem:[%s387 + $0x18] sm:$0xff]
        %v447 = vld [vmem:[%s387 + $0x20] sm:$0xff]
        %v448 = vld [vmem:[%s387 + $0x28] sm:$0xff]
        %v449 = vld [vmem:[%s387 + $0x30] sm:$0xff]
        %v450 = vld [vmem:[%s387 + $0x38] sm:$0xff]
        %v451 = vld [vmem:[%s387 + $0x40] sm:$0xff]
        %v452 = vld [vmem:[%s387 + $0x48] sm:$0xff]
        %v453 = vld [vmem:[%s387 + $0x50] sm:$0xff]
        %v454 = vld [vmem:[%s387 + $0x58] sm:$0xff]
        %v455 = vld [vmem:[%s387 + $0x60] sm:$0xff]
        %v456 = vld [vmem:[%s387 + $0x68] sm:$0xff]
        %v457 = vld [vmem:[%s387 + $0x70] sm:$0xff]
        %v458 = vld [vmem:[%s387 + $0x78] sm:$0xff]
        %460 = vset.pattern.permute.xlu0 0
        %461 = vperm.xlu0 %460, %v389
        %v462 = vpop.permute.xlu0 %461
        %vm464 = vcmask 523264
        %v466 = vsel %vm464, %v388, 0
        %468 = vmatprep.subr.mxu0 %v444
        %469 = vmatpush1.msra.mxu0 %v443
        %470 = vmatprep.subr.mxu0 %v446
        %471 = vmatpush1.msra.mxu0 %v445
        %472 = vmatprep.subr.mxu0 %v448
        %473 = vmatpush1.msra.mxu0 %v447
        %474 = vmatprep.subr.mxu0 %v450
        %475 = vmatpush1.msra.mxu0 %v449
        %476 = vmatprep.subr.mxu0 %v452
        %477 = vmatpush1.msra.mxu0 %v451
        %478 = vmatprep.subr.mxu0 %v454
        %479 = vmatpush1.msra.mxu0 %v453
        %480 = vmatprep.subr.mxu0 %v456
        %481 = vmatpush1.msra.mxu0 %v455
        %482 = vmatprep.subr.mxu0 %v458
        %483 = vmatpush1.msra.mxu0 %v457
        %484 = vmatprep.subr.mxu0 0.0
        %485 = vmatpush1.msra.mxu0 0.0
        %486 = vmatprep.subr.mxu0 0.0
        %487 = vmatpush1.msra.mxu0 0.0
        %488 = vmatprep.subr.mxu0 0.0
        %489 = vmatpush1.msra.mxu0 0.0
        %490 = vmatprep.subr.mxu0 0.0
        %491 = vmatpush1.msra.mxu0 0.0
        %492 = vmatprep.subr.mxu0 0.0
        %493 = vmatpush1.msra.mxu0 0.0
        %494 = vmatprep.subr.mxu0 0.0
        %495 = vmatpush1.msra.mxu0 0.0
        %496 = vmatprep.subr.mxu0 0.0
        %497 = vmatpush1.msra.mxu0 0.0
        %498 = vmatprep.subr.mxu0 0.0
        %499 = vmatpush1.msra.mxu0 0.0
        %500 = vmatprep.subr.mxu0 0.0
        %501 = vmatpush1.msra.mxu0 0.0
        %502 = vmatprep.subr.mxu0 0.0
        %503 = vmatpush1.msra.mxu0 0.0
        %504 = vmatprep.subr.mxu0 0.0
        %505 = vmatpush1.msra.mxu0 0.0
        %506 = vmatprep.subr.mxu0 0.0
        %507 = vmatpush1.msra.mxu0 0.0
        %508 = vmatprep.subr.mxu0 0.0
        %509 = vmatpush1.msra.mxu0 0.0
        %510 = vmatprep.subr.mxu0 0.0
        %511 = vmatpush1.msra.mxu0 0.0
        %512 = vmatprep.subr.mxu0 0.0
        %513 = vmatpush1.msra.mxu0 0.0
        %514 = vmatprep.subr.mxu0 0.0
        %515 = vmatpush1.msra.mxu0 0.0
        %516 = vmatprep.subr.mxu0 0.0
        %517 = vmatpush1.msra.mxu0 0.0
        %518 = vmatprep.subr.mxu0 0.0
        %519 = vmatpush1.msra.mxu0 0.0
        %520 = vmatprep.subr.mxu0 0.0
        %521 = vmatpush1.msra.mxu0 0.0
        %522 = vmatprep.subr.mxu0 0.0
        %523 = vmatpush1.msra.mxu0 0.0
        %524 = vmatprep.subr.mxu0 0.0
        %525 = vmatpush1.msra.mxu0 0.0
        %526 = vmatprep.subr.mxu0 0.0
        %527 = vmatpush1.msra.mxu0 0.0
        %528 = vmatprep.subr.mxu0 0.0
        %529 = vmatpush1.msra.mxu0 0.0
        %530 = vmatprep.subr.mxu0 0.0
        %531 = vmatpush1.msra.mxu0 0.0
        %532 = vmatprep.mubr.f32.mxu0 0.0
        %533 = vmatmul.mubr.f32.gmra.mrb[0].mxu0 %v466
        %v534 = vpop.f32.mrb[0].mxu0
        %v535 = vadd.f32 %v462, %v534
        %v536 = vpop.f32.mrb[0].mxu0
        %v537 = vadd.f32 %v462, %v536
        %538 = vdwg.mxu0
        %v539 = vmax.f32 %v535, 0.0
        %v540 = vmax.f32 %v537, 0.0
        %541 = vrot.lane.b32.xlu0 %v539, 68
        %v542 = vpop.permute.xlu0 %541
        %543 = vrot.lane.b32.xlu0 %v540, 68
        %v544 = vpop.permute.xlu0 %543
        %v545 = vlaneseq
        %v546 = vand.u32 %v545, 127
        %vm547 = vcmp.lt.s32.totalorder %v546, 68
        %v548 = vsel %vm547, %v542, %v544
        %v549 = vsel %vm547, %v544, %v542
        %v551 = vlaneseq
        %v552 = vshrl.u32 %v551, 7
        %v553 = vsub.s32 0, %v552
        %v554 = vrot.slane %v428, %v553
        %v555 = vlaneseq
        %v556 = vshrl.u32 %v555, 7
        %v557 = vsub.s32 1, %v556
        %v558 = vrot.slane %v428, %v557
        %v561 = vmul.f32 %v549, %v554
        %v562 = vmul.f32 %v548, %v558
        %563 = vrot.lane.b32.xlu0 %v539, 64
        %v564 = vpop.permute.xlu0 %563
        %565 = vrot.lane.b32.xlu0 %v540, 64
        %v566 = vpop.permute.xlu0 %565
        %vm567 = vcmp.lt.s32.totalorder %v546, 64
        %v568 = vsel %vm567, %v564, %v566
        %v569 = vsel %vm567, %v566, %v564
        %v571 = vlaneseq
        %v572 = vshrl.u32 %v571, 7
        %v573 = vsub.s32 0, %v572
        %v574 = vrot.slane %v430, %v573
        %v575 = vlaneseq
        %v576 = vshrl.u32 %v575, 7
        %v577 = vsub.s32 1, %v576
        %v578 = vrot.slane %v430, %v577
        %v581 = vmul.f32 %v569, %v574
        %v582 = vmul.f32 %v568, %v578
        %vm583 = vcmask 64512
        %v585 = vsel %vm583, %v396, 0
        %587 = vmatprep.subr.mxu0 %v582
        %588 = vmatpush1.msra.mxu0 %v581
        %589 = vmatprep.subr.mxu0 0.0
        %590 = vmatpush1.msra.mxu0 0.0
        %591 = vmatprep.subr.mxu0 0.0
        %592 = vmatpush1.msra.mxu0 0.0
        %593 = vmatprep.subr.mxu0 0.0
        %594 = vmatpush1.msra.mxu0 0.0
        %595 = vmatprep.subr.mxu0 0.0
        %596 = vmatpush1.msra.mxu0 0.0
        %597 = vmatprep.subr.mxu0 0.0
        %598 = vmatpush1.msra.mxu0 0.0
        %599 = vmatprep.subr.mxu0 0.0
        %600 = vmatpush1.msra.mxu0 0.0
        %601 = vmatprep.subr.mxu0 0.0
        %602 = vmatpush1.msra.mxu0 0.0
        %603 = vmatprep.subr.mxu0 0.0
        %604 = vmatpush1.msra.mxu0 0.0
        %605 = vmatprep.subr.mxu0 0.0
        %606 = vmatpush1.msra.mxu0 0.0
        %607 = vmatprep.subr.mxu0 0.0
        %608 = vmatpush1.msra.mxu0 0.0
        %609 = vmatprep.subr.mxu0 0.0
        %610 = vmatpush1.msra.mxu0 0.0
        %611 = vmatprep.subr.mxu0 0.0
        %612 = vmatpush1.msra.mxu0 0.0
        %613 = vmatprep.subr.mxu0 0.0
        %614 = vmatpush1.msra.mxu0 0.0
        %615 = vmatprep.subr.mxu0 0.0
        %616 = vmatpush1.msra.mxu0 0.0
        %617 = vmatprep.subr.mxu0 0.0
        %618 = vmatpush1.msra.mxu0 0.0
        %619 = vmatprep.subr.mxu0 0.0
        %620 = vmatpush1.msra.mxu0 0.0
        %621 = vmatprep.subr.mxu0 0.0
        %622 = vmatpush1.msra.mxu0 0.0
        %623 = vmatprep.subr.mxu0 0.0
        %624 = vmatpush1.msra.mxu0 0.0
        %625 = vmatprep.subr.mxu0 0.0
        %626 = vmatpush1.msra.mxu0 0.0
        %627 = vmatprep.subr.mxu0 0.0
        %628 = vmatpush1.msra.mxu0 0.0
        %629 = vmatprep.subr.mxu0 0.0
        %630 = vmatpush1.msra.mxu0 0.0
        %631 = vmatprep.subr.mxu0 0.0
        %632 = vmatpush1.msra.mxu0 0.0
        %633 = vmatprep.subr.mxu0 0.0
        %634 = vmatpush1.msra.mxu0 0.0
        %635 = vmatprep.subr.mxu0 0.0
        %636 = vmatpush1.msra.mxu0 0.0
        %637 = vmatprep.subr.mxu0 0.0
        %638 = vmatpush1.msra.mxu0 0.0
        %639 = vmatprep.subr.mxu0 0.0
        %640 = vmatpush1.msra.mxu0 0.0
        %641 = vmatprep.subr.mxu0 0.0
        %642 = vmatpush1.msra.mxu0 0.0
        %643 = vmatprep.subr.mxu0 0.0
        %644 = vmatpush1.msra.mxu0 0.0
        %645 = vmatprep.subr.mxu0 0.0
        %646 = vmatpush1.msra.mxu0 0.0
        %647 = vmatprep.subr.mxu0 0.0
        %648 = vmatpush1.msra.mxu0 0.0
        %649 = vmatprep.subr.mxu0 0.0
        %650 = vmatpush1.msra.mxu0 0.0
        %651 = vmatprep.mubr.f32.mxu0 0.0
        %652 = vmatmul.mubr.f32.gmra.mrb[0].mxu0 %v585
        %v653 = vpop.f32.mrb[0].mxu0
        %v654 = vadd.f32 0.0, %v653
        %v655 = vpop.f32.mrb[0].mxu0
        %v656 = vadd.f32 0.0, %v655
        %657 = vdwg.mxu0
        %v659 = vsel %vm583, %v394, 0
        %661 = vmatprep.subr.mxu0 %v562
        %662 = vmatpush1.msra.mxu0 %v561
        %663 = vmatprep.subr.mxu0 0.0
        %664 = vmatpush1.msra.mxu0 0.0
        %665 = vmatprep.subr.mxu0 0.0
        %666 = vmatpush1.msra.mxu0 0.0
        %667 = vmatprep.subr.mxu0 0.0
        %668 = vmatpush1.msra.mxu0 0.0
        %669 = vmatprep.subr.mxu0 0.0
        %670 = vmatpush1.msra.mxu0 0.0
        %671 = vmatprep.subr.mxu0 0.0
        %672 = vmatpush1.msra.mxu0 0.0
        %673 = vmatprep.subr.mxu0 0.0
        %674 = vmatpush1.msra.mxu0 0.0
        %675 = vmatprep.subr.mxu0 0.0
        %676 = vmatpush1.msra.mxu0 0.0
        %677 = vmatprep.subr.mxu0 0.0
        %678 = vmatpush1.msra.mxu0 0.0
        %679 = vmatprep.subr.mxu0 0.0
        %680 = vmatpush1.msra.mxu0 0.0
        %681 = vmatprep.subr.mxu0 0.0
        %682 = vmatpush1.msra.mxu0 0.0
        %683 = vmatprep.subr.mxu0 0.0
        %684 = vmatpush1.msra.mxu0 0.0
        %685 = vmatprep.subr.mxu0 0.0
        %686 = vmatpush1.msra.mxu0 0.0
        %687 = vmatprep.subr.mxu0 0.0
        %688 = vmatpush1.msra.mxu0 0.0
        %689 = vmatprep.subr.mxu0 0.0
        %690 = vmatpush1.msra.mxu0 0.0
        %691 = vmatprep.subr.mxu0 0.0
        %692 = vmatpush1.msra.mxu0 0.0
        %693 = vmatprep.subr.mxu0 0.0
        %694 = vmatpush1.msra.mxu0 0.0
        %695 = vmatprep.subr.mxu0 0.0
        %696 = vmatpush1.msra.mxu0 0.0
        %697 = vmatprep.subr.mxu0 0.0
        %698 = vmatpush1.msra.mxu0 0.0
        %699 = vmatprep.subr.mxu0 0.0
        %700 = vmatpush1.msra.mxu0 0.0
        %701 = vmatprep.subr.mxu0 0.0
        %702 = vmatpush1.msra.mxu0 0.0
        %703 = vmatprep.subr.mxu0 0.0
        %704 = vmatpush1.msra.mxu0 0.0
        %705 = vmatprep.subr.mxu0 0.0
        %706 = vmatpush1.msra.mxu0 0.0
        %707 = vmatprep.subr.mxu0 0.0
        %708 = vmatpush1.msra.mxu0 0.0
        %709 = vmatprep.subr.mxu0 0.0
        %710 = vmatpush1.msra.mxu0 0.0
        %711 = vmatprep.subr.mxu0 0.0
        %712 = vmatpush1.msra.mxu0 0.0
        %713 = vmatprep.subr.mxu0 0.0
        %714 = vmatpush1.msra.mxu0 0.0
        %715 = vmatprep.subr.mxu0 0.0
        %716 = vmatpush1.msra.mxu0 0.0
        %717 = vmatprep.subr.mxu0 0.0
        %718 = vmatpush1.msra.mxu0 0.0
        %719 = vmatprep.subr.mxu0 0.0
        %720 = vmatpush1.msra.mxu0 0.0
        %721 = vmatprep.subr.mxu0 0.0
        %722 = vmatpush1.msra.mxu0 0.0
        %723 = vmatprep.subr.mxu0 0.0
        %724 = vmatpush1.msra.mxu0 0.0
        %725 = vmatprep.mubr.f32.mxu0 0.0
        %726 = vmatmul.mubr.f32.gmra.mrb[0].mxu0 %v659
        %v727 = vpop.f32.mrb[0].mxu0
        %v728 = vadd.f32 %v654, %v727
        %v729 = vpop.f32.mrb[0].mxu0
        %v730 = vadd.f32 %v656, %v729
        %731 = vdwg.mxu0
        %732 = vrot.lane.b32.xlu0 %v539, 60
        %v733 = vpop.permute.xlu0 %732
        %734 = vrot.lane.b32.xlu0 %v540, 60
        %v735 = vpop.permute.xlu0 %734
        %vm736 = vcmp.lt.s32.totalorder %v546, 60
        %v737 = vsel %vm736, %v733, %v735
        %v738 = vsel %vm736, %v735, %v733
        %v740 = vlaneseq
        %v741 = vshrl.u32 %v740, 7
        %v742 = vsub.s32 0, %v741
        %v743 = vrot.slane %v432, %v742
        %v744 = vlaneseq
        %v745 = vshrl.u32 %v744, 7
        %v746 = vsub.s32 1, %v745
        %v747 = vrot.slane %v432, %v746
        %v750 = vmul.f32 %v738, %v743
        %v751 = vmul.f32 %v737, %v747
        %v753 = vsel %vm583, %v398, 0
        %755 = vmatprep.subr.mxu0 %v751
        %756 = vmatpush1.msra.mxu0 %v750
        %757 = vmatprep.subr.mxu0 0.0
        %758 = vmatpush1.msra.mxu0 0.0
        %759 = vmatprep.subr.mxu0 0.0
        %760 = vmatpush1.msra.mxu0 0.0
        %761 = vmatprep.subr.mxu0 0.0
        %762 = vmatpush1.msra.mxu0 0.0
        %763 = vmatprep.subr.mxu0 0.0
        %764 = vmatpush1.msra.mxu0 0.0
        %765 = vmatprep.subr.mxu0 0.0
        %766 = vmatpush1.msra.mxu0 0.0
        %767 = vmatprep.subr.mxu0 0.0
        %768 = vmatpush1.msra.mxu0 0.0
        %769 = vmatprep.subr.mxu0 0.0
        %770 = vmatpush1.msra.mxu0 0.0
        %771 = vmatprep.subr.mxu0 0.0
        %772 = vmatpush1.msra.mxu0 0.0
        %773 = vmatprep.subr.mxu0 0.0
        %774 = vmatpush1.msra.mxu0 0.0
        %775 = vmatprep.subr.mxu0 0.0
        %776 = vmatpush1.msra.mxu0 0.0
        %777 = vmatprep.subr.mxu0 0.0
        %778 = vmatpush1.msra.mxu0 0.0
        %779 = vmatprep.subr.mxu0 0.0
        %780 = vmatpush1.msra.mxu0 0.0
        %781 = vmatprep.subr.mxu0 0.0
        %782 = vmatpush1.msra.mxu0 0.0
        %783 = vmatprep.subr.mxu0 0.0
        %784 = vmatpush1.msra.mxu0 0.0
        %785 = vmatprep.subr.mxu0 0.0
        %786 = vmatpush1.msra.mxu0 0.0
        %787 = vmatprep.subr.mxu0 0.0
        %788 = vmatpush1.msra.mxu0 0.0
        %789 = vmatprep.subr.mxu0 0.0
        %790 = vmatpush1.msra.mxu0 0.0
        %791 = vmatprep.subr.mxu0 0.0
        %792 = vmatpush1.msra.mxu0 0.0
        %793 = vmatprep.subr.mxu0 0.0
        %794 = vmatpush1.msra.mxu0 0.0
        %795 = vmatprep.subr.mxu0 0.0
        %796 = vmatpush1.msra.mxu0 0.0
        %797 = vmatprep.subr.mxu0 0.0
        %798 = vmatpush1.msra.mxu0 0.0
        %799 = vmatprep.subr.mxu0 0.0
        %800 = vmatpush1.msra.mxu0 0.0
        %801 = vmatprep.subr.mxu0 0.0
        %802 = vmatpush1.msra.mxu0 0.0
        %803 = vmatprep.subr.mxu0 0.0
        %804 = vmatpush1.msra.mxu0 0.0
        %805 = vmatprep.subr.mxu0 0.0
        %806 = vmatpush1.msra.mxu0 0.0
        %807 = vmatprep.subr.mxu0 0.0
        %808 = vmatpush1.msra.mxu0 0.0
        %809 = vmatprep.subr.mxu0 0.0
        %810 = vmatpush1.msra.mxu0 0.0
        %811 = vmatprep.subr.mxu0 0.0
        %812 = vmatpush1.msra.mxu0 0.0
        %813 = vmatprep.subr.mxu0 0.0
        %814 = vmatpush1.msra.mxu0 0.0
        %815 = vmatprep.subr.mxu0 0.0
        %816 = vmatpush1.msra.mxu0 0.0
        %817 = vmatprep.subr.mxu0 0.0
        %818 = vmatpush1.msra.mxu0 0.0
        %819 = vmatprep.mubr.f32.mxu0 0.0
        %820 = vmatmul.mubr.f32.gmra.mrb[0].mxu0 %v753
        %v821 = vpop.f32.mrb[0].mxu0
        %v822 = vadd.f32 0.0, %v821
        %v823 = vpop.f32.mrb[0].mxu0
        %v824 = vadd.f32 0.0, %v823
        %825 = vdwg.mxu0
        %v826 = vadd.f32 %v728, %v822
        %v827 = vadd.f32 %v730, %v824
        %828 = vrot.lane.b32.xlu0 %v539, 4
        %v829 = vpop.permute.xlu0 %828
        %830 = vrot.lane.b32.xlu0 %v540, 4
        %v831 = vpop.permute.xlu0 %830
        %vm832 = vcmp.lt.s32.totalorder %v546, 4
        %v833 = vsel %vm832, %v829, %v831
        %v834 = vsel %vm832, %v831, %v829
        %v836 = vlaneseq
        %v837 = vshrl.u32 %v836, 7
        %v838 = vsub.s32 0, %v837
        %v839 = vrot.slane %v434, %v838
        %v840 = vlaneseq
        %v841 = vshrl.u32 %v840, 7
        %v842 = vsub.s32 1, %v841
        %v843 = vrot.slane %v434, %v842
        %v846 = vmul.f32 %v834, %v839
        %v847 = vmul.f32 %v833, %v843
        %v849 = vsel %vm583, %v400, 0
        %851 = vmatprep.subr.mxu0 %v847
        %852 = vmatpush1.msra.mxu0 %v846
        %853 = vmatprep.subr.mxu0 0.0
        %854 = vmatpush1.msra.mxu0 0.0
        %855 = vmatprep.subr.mxu0 0.0
        %856 = vmatpush1.msra.mxu0 0.0
        %857 = vmatprep.subr.mxu0 0.0
        %858 = vmatpush1.msra.mxu0 0.0
        %859 = vmatprep.subr.mxu0 0.0
        %860 = vmatpush1.msra.mxu0 0.0
        %861 = vmatprep.subr.mxu0 0.0
        %862 = vmatpush1.msra.mxu0 0.0
        %863 = vmatprep.subr.mxu0 0.0
        %864 = vmatpush1.msra.mxu0 0.0
        %865 = vmatprep.subr.mxu0 0.0
        %866 = vmatpush1.msra.mxu0 0.0
        %867 = vmatprep.subr.mxu0 0.0
        %868 = vmatpush1.msra.mxu0 0.0
        %869 = vmatprep.subr.mxu0 0.0
        %870 = vmatpush1.msra.mxu0 0.0
        %871 = vmatprep.subr.mxu0 0.0
        %872 = vmatpush1.msra.mxu0 0.0
        %873 = vmatprep.subr.mxu0 0.0
        %874 = vmatpush1.msra.mxu0 0.0
        %875 = vmatprep.subr.mxu0 0.0
        %876 = vmatpush1.msra.mxu0 0.0
        %877 = vmatprep.subr.mxu0 0.0
        %878 = vmatpush1.msra.mxu0 0.0
        %879 = vmatprep.subr.mxu0 0.0
        %880 = vmatpush1.msra.mxu0 0.0
        %881 = vmatprep.subr.mxu0 0.0
        %882 = vmatpush1.msra.mxu0 0.0
        %883 = vmatprep.subr.mxu0 0.0
        %884 = vmatpush1.msra.mxu0 0.0
        %885 = vmatprep.subr.mxu0 0.0
        %886 = vmatpush1.msra.mxu0 0.0
        %887 = vmatprep.subr.mxu0 0.0
        %888 = vmatpush1.msra.mxu0 0.0
        %889 = vmatprep.subr.mxu0 0.0
        %890 = vmatpush1.msra.mxu0 0.0
        %891 = vmatprep.subr.mxu0 0.0
        %892 = vmatpush1.msra.mxu0 0.0
        %893 = vmatprep.subr.mxu0 0.0
        %894 = vmatpush1.msra.mxu0 0.0
        %895 = vmatprep.subr.mxu0 0.0
        %896 = vmatpush1.msra.mxu0 0.0
        %897 = vmatprep.subr.mxu0 0.0
        %898 = vmatpush1.msra.mxu0 0.0
        %899 = vmatprep.subr.mxu0 0.0
        %900 = vmatpush1.msra.mxu0 0.0
        %901 = vmatprep.subr.mxu0 0.0
        %902 = vmatpush1.msra.mxu0 0.0
        %903 = vmatprep.subr.mxu0 0.0
        %904 = vmatpush1.msra.mxu0 0.0
        %905 = vmatprep.subr.mxu0 0.0
        %906 = vmatpush1.msra.mxu0 0.0
        %907 = vmatprep.subr.mxu0 0.0
        %908 = vmatpush1.msra.mxu0 0.0
        %909 = vmatprep.subr.mxu0 0.0
        %910 = vmatpush1.msra.mxu0 0.0
        %911 = vmatprep.subr.mxu0 0.0
        %912 = vmatpush1.msra.mxu0 0.0
        %913 = vmatprep.subr.mxu0 0.0
        %914 = vmatpush1.msra.mxu0 0.0
        %915 = vmatprep.mubr.f32.mxu0 0.0
        %916 = vmatmul.mubr.f32.gmra.mrb[0].mxu0 %v849
        %v917 = vpop.f32.mrb[0].mxu0
        %v918 = vadd.f32 0.0, %v917
        %v919 = vpop.f32.mrb[0].mxu0
        %v920 = vadd.f32 0.0, %v919
        %921 = vdwg.mxu0
        %v922 = vadd.f32 %v826, %v918
        %v923 = vadd.f32 %v827, %v920
        %v925 = vsel %vm583, %v402, 0
        %927 = vmatprep.subr.mxu0 %v540
        %928 = vmatpush1.msra.mxu0 %v539
        %929 = vmatprep.subr.mxu0 0.0
        %930 = vmatpush1.msra.mxu0 0.0
        %931 = vmatprep.subr.mxu0 0.0
        %932 = vmatpush1.msra.mxu0 0.0
        %933 = vmatprep.subr.mxu0 0.0
        %934 = vmatpush1.msra.mxu0 0.0
        %935 = vmatprep.subr.mxu0 0.0
        %936 = vmatpush1.msra.mxu0 0.0
        %937 = vmatprep.subr.mxu0 0.0
        %938 = vmatpush1.msra.mxu0 0.0
        %939 = vmatprep.subr.mxu0 0.0
        %940 = vmatpush1.msra.mxu0 0.0
        %941 = vmatprep.subr.mxu0 0.0
        %942 = vmatpush1.msra.mxu0 0.0
        %943 = vmatprep.subr.mxu0 0.0
        %944 = vmatpush1.msra.mxu0 0.0
        %945 = vmatprep.subr.mxu0 0.0
        %946 = vmatpush1.msra.mxu0 0.0
        %947 = vmatprep.subr.mxu0 0.0
        %948 = vmatpush1.msra.mxu0 0.0
        %949 = vmatprep.subr.mxu0 0.0
        %950 = vmatpush1.msra.mxu0 0.0
        %951 = vmatprep.subr.mxu0 0.0
        %952 = vmatpush1.msra.mxu0 0.0
        %953 = vmatprep.subr.mxu0 0.0
        %954 = vmatpush1.msra.mxu0 0.0
        %955 = vmatprep.subr.mxu0 0.0
        %956 = vmatpush1.msra.mxu0 0.0
        %957 = vmatprep.subr.mxu0 0.0
        %958 = vmatpush1.msra.mxu0 0.0
        %959 = vmatprep.subr.mxu0 0.0
        %960 = vmatpush1.msra.mxu0 0.0
        %961 = vmatprep.subr.mxu0 0.0
        %962 = vmatpush1.msra.mxu0 0.0
        %963 = vmatprep.subr.mxu0 0.0
        %964 = vmatpush1.msra.mxu0 0.0
        %965 = vmatprep.subr.mxu0 0.0
        %966 = vmatpush1.msra.mxu0 0.0
        %967 = vmatprep.subr.mxu0 0.0
        %968 = vmatpush1.msra.mxu0 0.0
        %969 = vmatprep.subr.mxu0 0.0
        %970 = vmatpush1.msra.mxu0 0.0
        %971 = vmatprep.subr.mxu0 0.0
        %972 = vmatpush1.msra.mxu0 0.0
        %973 = vmatprep.subr.mxu0 0.0
        %974 = vmatpush1.msra.mxu0 0.0
        %975 = vmatprep.subr.mxu0 0.0
        %976 = vmatpush1.msra.mxu0 0.0
        %977 = vmatprep.subr.mxu0 0.0
        %978 = vmatpush1.msra.mxu0 0.0
        %979 = vmatprep.subr.mxu0 0.0
        %980 = vmatpush1.msra.mxu0 0.0
        %981 = vmatprep.subr.mxu0 0.0
        %982 = vmatpush1.msra.mxu0 0.0
        %983 = vmatprep.subr.mxu0 0.0
        %984 = vmatpush1.msra.mxu0 0.0
        %985 = vmatprep.subr.mxu0 0.0
        %986 = vmatpush1.msra.mxu0 0.0
        %987 = vmatprep.subr.mxu0 0.0
        %988 = vmatpush1.msra.mxu0 0.0
        %989 = vmatprep.subr.mxu0 0.0
        %990 = vmatpush1.msra.mxu0 0.0
        %991 = vmatprep.mubr.f32.mxu0 0.0
        %992 = vmatmul.mubr.f32.gmra.mrb[0].mxu0 %v925
        %v993 = vpop.f32.mrb[0].mxu0
        %v994 = vadd.f32 0.0, %v993
        %v995 = vpop.f32.mrb[0].mxu0
        %v996 = vadd.f32 0.0, %v995
        %997 = vdwg.mxu0
        %v998 = vadd.f32 %v922, %v994
        %v999 = vadd.f32 %v923, %v996
        %1000 = vrot.lane.b32.xlu0 %v539, 124
        %v1001 = vpop.permute.xlu0 %1000
        %1002 = vrot.lane.b32.xlu0 %v540, 124
        %v1003 = vpop.permute.xlu0 %1002
        %vm1004 = vcmp.lt.s32.totalorder %v546, 124
        %v1005 = vsel %vm1004, %v1001, %v1003
        %v1006 = vsel %vm1004, %v1003, %v1001
        %v1008 = vlaneseq
        %v1009 = vshrl.u32 %v1008, 7
        %v1010 = vsub.s32 0, %v1009
        %v1011 = vrot.slane %v436, %v1010
        %v1012 = vlaneseq
        %v1013 = vshrl.u32 %v1012, 7
        %v1014 = vsub.s32 1, %v1013
        %v1015 = vrot.slane %v436, %v1014
        %v1018 = vmul.f32 %v1005, %v1011
        %v1019 = vmul.f32 %v1006, %v1015
        %v1021 = vsel %vm583, %v404, 0
        %1023 = vmatprep.subr.mxu0 %v1019
        %1024 = vmatpush1.msra.mxu0 %v1018
        %1025 = vmatprep.subr.mxu0 0.0
        %1026 = vmatpush1.msra.mxu0 0.0
        %1027 = vmatprep.subr.mxu0 0.0
        %1028 = vmatpush1.msra.mxu0 0.0
        %1029 = vmatprep.subr.mxu0 0.0
        %1030 = vmatpush1.msra.mxu0 0.0
        %1031 = vmatprep.subr.mxu0 0.0
        %1032 = vmatpush1.msra.mxu0 0.0
        %1033 = vmatprep.subr.mxu0 0.0
        %1034 = vmatpush1.msra.mxu0 0.0
        %1035 = vmatprep.subr.mxu0 0.0
        %1036 = vmatpush1.msra.mxu0 0.0
        %1037 = vmatprep.subr.mxu0 0.0
        %1038 = vmatpush1.msra.mxu0 0.0
        %1039 = vmatprep.subr.mxu0 0.0
        %1040 = vmatpush1.msra.mxu0 0.0
        %1041 = vmatprep.subr.mxu0 0.0
        %1042 = vmatpush1.msra.mxu0 0.0
        %1043 = vmatprep.subr.mxu0 0.0
        %1044 = vmatpush1.msra.mxu0 0.0
        %1045 = vmatprep.subr.mxu0 0.0
        %1046 = vmatpush1.msra.mxu0 0.0
        %1047 = vmatprep.subr.mxu0 0.0
        %1048 = vmatpush1.msra.mxu0 0.0
        %1049 = vmatprep.subr.mxu0 0.0
        %1050 = vmatpush1.msra.mxu0 0.0
        %1051 = vmatprep.subr.mxu0 0.0
        %1052 = vmatpush1.msra.mxu0 0.0
        %1053 = vmatprep.subr.mxu0 0.0
        %1054 = vmatpush1.msra.mxu0 0.0
        %1055 = vmatprep.subr.mxu0 0.0
        %1056 = vmatpush1.msra.mxu0 0.0
        %1057 = vmatprep.subr.mxu0 0.0
        %1058 = vmatpush1.msra.mxu0 0.0
        %1059 = vmatprep.subr.mxu0 0.0
        %1060 = vmatpush1.msra.mxu0 0.0
        %1061 = vmatprep.subr.mxu0 0.0
        %1062 = vmatpush1.msra.mxu0 0.0
        %1063 = vmatprep.subr.mxu0 0.0
        %1064 = vmatpush1.msra.mxu0 0.0
        %1065 = vmatprep.subr.mxu0 0.0
        %1066 = vmatpush1.msra.mxu0 0.0
        %1067 = vmatprep.subr.mxu0 0.0
        %1068 = vmatpush1.msra.mxu0 0.0
        %1069 = vmatprep.subr.mxu0 0.0
        %1070 = vmatpush1.msra.mxu0 0.0
        %1071 = vmatprep.subr.mxu0 0.0
        %1072 = vmatpush1.msra.mxu0 0.0
        %1073 = vmatprep.subr.mxu0 0.0
        %1074 = vmatpush1.msra.mxu0 0.0
        %1075 = vmatprep.subr.mxu0 0.0
        %1076 = vmatpush1.msra.mxu0 0.0
        %1077 = vmatprep.subr.mxu0 0.0
        %1078 = vmatpush1.msra.mxu0 0.0
        %1079 = vmatprep.subr.mxu0 0.0
        %1080 = vmatpush1.msra.mxu0 0.0
        %1081 = vmatprep.subr.mxu0 0.0
        %1082 = vmatpush1.msra.mxu0 0.0
        %1083 = vmatprep.subr.mxu0 0.0
        %1084 = vmatpush1.msra.mxu0 0.0
        %1085 = vmatprep.subr.mxu0 0.0
        %1086 = vmatpush1.msra.mxu0 0.0
        %1087 = vmatprep.mubr.f32.mxu0 0.0
        %1088 = vmatmul.mubr.f32.gmra.mrb[0].mxu0 %v1021
        %v1089 = vpop.f32.mrb[0].mxu0
        %v1090 = vadd.f32 0.0, %v1089
        %v1091 = vpop.f32.mrb[0].mxu0
        %v1092 = vadd.f32 0.0, %v1091
        %1093 = vdwg.mxu0
        %v1094 = vadd.f32 %v998, %v1090
        %v1095 = vadd.f32 %v999, %v1092
        %v1097 = vlaneseq
        %v1098 = vshrl.u32 %v1097, 7
        %v1099 = vsub.s32 0, %v1098
        %v1100 = vrot.slane %v438, %v1099
        %v1101 = vlaneseq
        %v1102 = vshrl.u32 %v1101, 7
        %v1103 = vsub.s32 1, %v1102
        %v1104 = vrot.slane %v438, %v1103
        %v1107 = vmul.f32 %v548, %v1100
        %v1108 = vmul.f32 %v549, %v1104
        %v1110 = vsel %vm583, %v406, 0
        %1112 = vmatprep.subr.mxu0 %v1108
        %1113 = vmatpush1.msra.mxu0 %v1107
        %1114 = vmatprep.subr.mxu0 0.0
        %1115 = vmatpush1.msra.mxu0 0.0
        %1116 = vmatprep.subr.mxu0 0.0
        %1117 = vmatpush1.msra.mxu0 0.0
        %1118 = vmatprep.subr.mxu0 0.0
        %1119 = vmatpush1.msra.mxu0 0.0
        %1120 = vmatprep.subr.mxu0 0.0
        %1121 = vmatpush1.msra.mxu0 0.0
        %1122 = vmatprep.subr.mxu0 0.0
        %1123 = vmatpush1.msra.mxu0 0.0
        %1124 = vmatprep.subr.mxu0 0.0
        %1125 = vmatpush1.msra.mxu0 0.0
        %1126 = vmatprep.subr.mxu0 0.0
        %1127 = vmatpush1.msra.mxu0 0.0
        %1128 = vmatprep.subr.mxu0 0.0
        %1129 = vmatpush1.msra.mxu0 0.0
        %1130 = vmatprep.subr.mxu0 0.0
        %1131 = vmatpush1.msra.mxu0 0.0
        %1132 = vmatprep.subr.mxu0 0.0
        %1133 = vmatpush1.msra.mxu0 0.0
        %1134 = vmatprep.subr.mxu0 0.0
        %1135 = vmatpush1.msra.mxu0 0.0
        %1136 = vmatprep.subr.mxu0 0.0
        %1137 = vmatpush1.msra.mxu0 0.0
        %1138 = vmatprep.subr.mxu0 0.0
        %1139 = vmatpush1.msra.mxu0 0.0
        %1140 = vmatprep.subr.mxu0 0.0
        %1141 = vmatpush1.msra.mxu0 0.0
        %1142 = vmatprep.subr.mxu0 0.0
        %1143 = vmatpush1.msra.mxu0 0.0
        %1144 = vmatprep.subr.mxu0 0.0
        %1145 = vmatpush1.msra.mxu0 0.0
        %1146 = vmatprep.subr.mxu0 0.0
        %1147 = vmatpush1.msra.mxu0 0.0
        %1148 = vmatprep.subr.mxu0 0.0
        %1149 = vmatpush1.msra.mxu0 0.0
        %1150 = vmatprep.subr.mxu0 0.0
        %1151 = vmatpush1.msra.mxu0 0.0
        %1152 = vmatprep.subr.mxu0 0.0
        %1153 = vmatpush1.msra.mxu0 0.0
        %1154 = vmatprep.subr.mxu0 0.0
        %1155 = vmatpush1.msra.mxu0 0.0
        %1156 = vmatprep.subr.mxu0 0.0
        %1157 = vmatpush1.msra.mxu0 0.0
        %1158 = vmatprep.subr.mxu0 0.0
        %1159 = vmatpush1.msra.mxu0 0.0
        %1160 = vmatprep.subr.mxu0 0.0
        %1161 = vmatpush1.msra.mxu0 0.0
        %1162 = vmatprep.subr.mxu0 0.0
        %1163 = vmatpush1.msra.mxu0 0.0
        %1164 = vmatprep.subr.mxu0 0.0
        %1165 = vmatpush1.msra.mxu0 0.0
        %1166 = vmatprep.subr.mxu0 0.0
        %1167 = vmatpush1.msra.mxu0 0.0
        %1168 = vmatprep.subr.mxu0 0.0
        %1169 = vmatpush1.msra.mxu0 0.0
        %1170 = vmatprep.subr.mxu0 0.0
        %1171 = vmatpush1.msra.mxu0 0.0
        %1172 = vmatprep.subr.mxu0 0.0
        %1173 = vmatpush1.msra.mxu0 0.0
        %1174 = vmatprep.subr.mxu0 0.0
        %1175 = vmatpush1.msra.mxu0 0.0
        %1176 = vmatprep.mubr.f32.mxu0 0.0
        %1177 = vmatmul.mubr.f32.gmra.mrb[0].mxu0 %v1110
        %v1178 = vpop.f32.mrb[0].mxu0
        %v1179 = vadd.f32 0.0, %v1178
        %v1180 = vpop.f32.mrb[0].mxu0
        %v1181 = vadd.f32 0.0, %v1180
        %1182 = vdwg.mxu0
        %v1183 = vadd.f32 %v1094, %v1179
        %v1184 = vadd.f32 %v1095, %v1181
        %v1186 = vlaneseq
        %v1187 = vshrl.u32 %v1186, 7
        %v1188 = vsub.s32 0, %v1187
        %v1189 = vrot.slane %v440, %v1188
        %v1190 = vlaneseq
        %v1191 = vshrl.u32 %v1190, 7
        %v1192 = vsub.s32 1, %v1191
        %v1193 = vrot.slane %v440, %v1192
        %v1196 = vmul.f32 %v568, %v1189
        %v1197 = vmul.f32 %v569, %v1193
        %v1199 = vsel %vm583, %v408, 0
        %1201 = vmatprep.subr.mxu0 %v1197
        %1202 = vmatpush1.msra.mxu0 %v1196
        %1203 = vmatprep.subr.mxu0 0.0
        %1204 = vmatpush1.msra.mxu0 0.0
        %1205 = vmatprep.subr.mxu0 0.0
        %1206 = vmatpush1.msra.mxu0 0.0
        %1207 = vmatprep.subr.mxu0 0.0
        %1208 = vmatpush1.msra.mxu0 0.0
        %1209 = vmatprep.subr.mxu0 0.0
        %1210 = vmatpush1.msra.mxu0 0.0
        %1211 = vmatprep.subr.mxu0 0.0
        %1212 = vmatpush1.msra.mxu0 0.0
        %1213 = vmatprep.subr.mxu0 0.0
        %1214 = vmatpush1.msra.mxu0 0.0
        %1215 = vmatprep.subr.mxu0 0.0
        %1216 = vmatpush1.msra.mxu0 0.0
        %1217 = vmatprep.subr.mxu0 0.0
        %1218 = vmatpush1.msra.mxu0 0.0
        %1219 = vmatprep.subr.mxu0 0.0
        %1220 = vmatpush1.msra.mxu0 0.0
        %1221 = vmatprep.subr.mxu0 0.0
        %1222 = vmatpush1.msra.mxu0 0.0
        %1223 = vmatprep.subr.mxu0 0.0
        %1224 = vmatpush1.msra.mxu0 0.0
        %1225 = vmatprep.subr.mxu0 0.0
        %1226 = vmatpush1.msra.mxu0 0.0
        %1227 = vmatprep.subr.mxu0 0.0
        %1228 = vmatpush1.msra.mxu0 0.0
        %1229 = vmatprep.subr.mxu0 0.0
        %1230 = vmatpush1.msra.mxu0 0.0
        %1231 = vmatprep.subr.mxu0 0.0
        %1232 = vmatpush1.msra.mxu0 0.0
        %1233 = vmatprep.subr.mxu0 0.0
        %1234 = vmatpush1.msra.mxu0 0.0
        %1235 = vmatprep.subr.mxu0 0.0
        %1236 = vmatpush1.msra.mxu0 0.0
        %1237 = vmatprep.subr.mxu0 0.0
        %1238 = vmatpush1.msra.mxu0 0.0
        %1239 = vmatprep.subr.mxu0 0.0
        %1240 = vmatpush1.msra.mxu0 0.0
        %1241 = vmatprep.subr.mxu0 0.0
        %1242 = vmatpush1.msra.mxu0 0.0
        %1243 = vmatprep.subr.mxu0 0.0
        %1244 = vmatpush1.msra.mxu0 0.0
        %1245 = vmatprep.subr.mxu0 0.0
        %1246 = vmatpush1.msra.mxu0 0.0
        %1247 = vmatprep.subr.mxu0 0.0
        %1248 = vmatpush1.msra.mxu0 0.0
        %1249 = vmatprep.subr.mxu0 0.0
        %1250 = vmatpush1.msra.mxu0 0.0
        %1251 = vmatprep.subr.mxu0 0.0
        %1252 = vmatpush1.msra.mxu0 0.0
        %1253 = vmatprep.subr.mxu0 0.0
        %1254 = vmatpush1.msra.mxu0 0.0
        %1255 = vmatprep.subr.mxu0 0.0
        %1256 = vmatpush1.msra.mxu0 0.0
        %1257 = vmatprep.subr.mxu0 0.0
        %1258 = vmatpush1.msra.mxu0 0.0
        %1259 = vmatprep.subr.mxu0 0.0
        %1260 = vmatpush1.msra.mxu0 0.0
        %1261 = vmatprep.subr.mxu0 0.0
        %1262 = vmatpush1.msra.mxu0 0.0
        %1263 = vmatprep.subr.mxu0 0.0
        %1264 = vmatpush1.msra.mxu0 0.0
        %1265 = vmatprep.mubr.f32.mxu0 0.0
        %1266 = vmatmul.mubr.f32.gmra.mrb[0].mxu0 %v1199
        %v1267 = vpop.f32.mrb[0].mxu0
        %v1268 = vadd.f32 0.0, %v1267
        %v1269 = vpop.f32.mrb[0].mxu0
        %v1270 = vadd.f32 0.0, %v1269
        %1271 = vdwg.mxu0
        %v1272 = vadd.f32 %v1183, %v1268
        %v1273 = vadd.f32 %v1184, %v1270
        %v1275 = vlaneseq
        %v1276 = vshrl.u32 %v1275, 7
        %v1277 = vsub.s32 0, %v1276
        %v1278 = vrot.slane %v442, %v1277
        %v1279 = vlaneseq
        %v1280 = vshrl.u32 %v1279, 7
        %v1281 = vsub.s32 1, %v1280
        %v1282 = vrot.slane %v442, %v1281
        %v1285 = vmul.f32 %v737, %v1278
        %v1286 = vmul.f32 %v738, %v1282
        %v1288 = vsel %vm583, %v410, 0
        %1290 = vmatprep.subr.mxu0 %v1286
        %1291 = vmatpush1.msra.mxu0 %v1285
        %1292 = vmatprep.subr.mxu0 0.0
        %1293 = vmatpush1.msra.mxu0 0.0
        %1294 = vmatprep.subr.mxu0 0.0
        %1295 = vmatpush1.msra.mxu0 0.0
        %1296 = vmatprep.subr.mxu0 0.0
        %1297 = vmatpush1.msra.mxu0 0.0
        %1298 = vmatprep.subr.mxu0 0.0
        %1299 = vmatpush1.msra.mxu0 0.0
        %1300 = vmatprep.subr.mxu0 0.0
        %1301 = vmatpush1.msra.mxu0 0.0
        %1302 = vmatprep.subr.mxu0 0.0
        %1303 = vmatpush1.msra.mxu0 0.0
        %1304 = vmatprep.subr.mxu0 0.0
        %1305 = vmatpush1.msra.mxu0 0.0
        %1306 = vmatprep.subr.mxu0 0.0
        %1307 = vmatpush1.msra.mxu0 0.0
        %1308 = vmatprep.subr.mxu0 0.0
        %1309 = vmatpush1.msra.mxu0 0.0
        %1310 = vmatprep.subr.mxu0 0.0
        %1311 = vmatpush1.msra.mxu0 0.0
        %1312 = vmatprep.subr.mxu0 0.0
        %1313 = vmatpush1.msra.mxu0 0.0
        %1314 = vmatprep.subr.mxu0 0.0
        %1315 = vmatpush1.msra.mxu0 0.0
        %1316 = vmatprep.subr.mxu0 0.0
        %1317 = vmatpush1.msra.mxu0 0.0
        %1318 = vmatprep.subr.mxu0 0.0
        %1319 = vmatpush1.msra.mxu0 0.0
        %1320 = vmatprep.subr.mxu0 0.0
        %1321 = vmatpush1.msra.mxu0 0.0
        %1322 = vmatprep.subr.mxu0 0.0
        %1323 = vmatpush1.msra.mxu0 0.0
        %1324 = vmatprep.subr.mxu0 0.0
        %1325 = vmatpush1.msra.mxu0 0.0
        %1326 = vmatprep.subr.mxu0 0.0
        %1327 = vmatpush1.msra.mxu0 0.0
        %1328 = vmatprep.subr.mxu0 0.0
        %1329 = vmatpush1.msra.mxu0 0.0
        %1330 = vmatprep.subr.mxu0 0.0
        %1331 = vmatpush1.msra.mxu0 0.0
        %1332 = vmatprep.subr.mxu0 0.0
        %1333 = vmatpush1.msra.mxu0 0.0
        %1334 = vmatprep.subr.mxu0 0.0
        %1335 = vmatpush1.msra.mxu0 0.0
        %1336 = vmatprep.subr.mxu0 0.0
        %1337 = vmatpush1.msra.mxu0 0.0
        %1338 = vmatprep.subr.mxu0 0.0
        %1339 = vmatpush1.msra.mxu0 0.0
        %1340 = vmatprep.subr.mxu0 0.0
        %1341 = vmatpush1.msra.mxu0 0.0
        %1342 = vmatprep.subr.mxu0 0.0
        %1343 = vmatpush1.msra.mxu0 0.0
        %1344 = vmatprep.subr.mxu0 0.0
        %1345 = vmatpush1.msra.mxu0 0.0
        %1346 = vmatprep.subr.mxu0 0.0
        %1347 = vmatpush1.msra.mxu0 0.0
        %1348 = vmatprep.subr.mxu0 0.0
        %1349 = vmatpush1.msra.mxu0 0.0
        %1350 = vmatprep.subr.mxu0 0.0
        %1351 = vmatpush1.msra.mxu0 0.0
        %1352 = vmatprep.subr.mxu0 0.0
        %1353 = vmatpush1.msra.mxu0 0.0
        %1354 = vmatprep.mubr.f32.mxu0 0.0
        %1355 = vmatmul.mubr.f32.gmra.mrb[0].mxu0 %v1288
        %v1356 = vpop.f32.mrb[0].mxu0
        %v1357 = vadd.f32 0.0, %v1356
        %v1358 = vpop.f32.mrb[0].mxu0
        %v1359 = vadd.f32 0.0, %v1358
        %1360 = vdwg.mxu0
        %v1361 = vadd.f32 %v1272, %v1357
        %v1362 = vadd.f32 %v1273, %v1359
        %1364 = vset.pattern.permute.xlu0 0
        %1365 = vperm.xlu0 %1364, %v390
        %v1366 = vpop.permute.xlu0 %1365
        %v1368 = vadd.f32 %v1361, %v1366
        %v1369 = vadd.f32 %v1362, %v1366
        %v1370 = vmax.f32 %v1368, 0.0
        %v1371 = vmax.f32 %v1369, 0.0
        %1372 = vrot.lane.b32.xlu0 %v1370, 68
        %v1373 = vpop.permute.xlu0 %1372
        %1374 = vrot.lane.b32.xlu0 %v1371, 68
        %v1375 = vpop.permute.xlu0 %1374
        %v1376 = vsel %vm547, %v1373, %v1375
        %v1377 = vsel %vm547, %v1375, %v1373
        %v1378 = vmul.f32 %v1377, %v554
        %v1379 = vmul.f32 %v1376, %v558
        %1380 = vrot.lane.b32.xlu0 %v1370, 64
        %v1381 = vpop.permute.xlu0 %1380
        %1382 = vrot.lane.b32.xlu0 %v1371, 64
        %v1383 = vpop.permute.xlu0 %1382
        %v1384 = vsel %vm567, %v1381, %v1383
        %v1385 = vsel %vm567, %v1383, %v1381
        %v1386 = vmul.f32 %v1385, %v574
        %v1387 = vmul.f32 %v1384, %v578
        %v1389 = vsel %vm583, %v413, 0
        %1391 = vmatprep.subr.mxu0 %v1387
        %1392 = vmatpush1.msra.mxu0 %v1386
        %1393 = vmatprep.subr.mxu0 0.0
        %1394 = vmatpush1.msra.mxu0 0.0
        %1395 = vmatprep.subr.mxu0 0.0
        %1396 = vmatpush1.msra.mxu0 0.0
        %1397 = vmatprep.subr.mxu0 0.0
        %1398 = vmatpush1.msra.mxu0 0.0
        %1399 = vmatprep.subr.mxu0 0.0
        %1400 = vmatpush1.msra.mxu0 0.0
        %1401 = vmatprep.subr.mxu0 0.0
        %1402 = vmatpush1.msra.mxu0 0.0
        %1403 = vmatprep.subr.mxu0 0.0
        %1404 = vmatpush1.msra.mxu0 0.0
        %1405 = vmatprep.subr.mxu0 0.0
        %1406 = vmatpush1.msra.mxu0 0.0
        %1407 = vmatprep.subr.mxu0 0.0
        %1408 = vmatpush1.msra.mxu0 0.0
        %1409 = vmatprep.subr.mxu0 0.0
        %1410 = vmatpush1.msra.mxu0 0.0
        %1411 = vmatprep.subr.mxu0 0.0
        %1412 = vmatpush1.msra.mxu0 0.0
        %1413 = vmatprep.subr.mxu0 0.0
        %1414 = vmatpush1.msra.mxu0 0.0
        %1415 = vmatprep.subr.mxu0 0.0
        %1416 = vmatpush1.msra.mxu0 0.0
        %1417 = vmatprep.subr.mxu0 0.0
        %1418 = vmatpush1.msra.mxu0 0.0
        %1419 = vmatprep.subr.mxu0 0.0
        %1420 = vmatpush1.msra.mxu0 0.0
        %1421 = vmatprep.subr.mxu0 0.0
        %1422 = vmatpush1.msra.mxu0 0.0
        %1423 = vmatprep.subr.mxu0 0.0
        %1424 = vmatpush1.msra.mxu0 0.0
        %1425 = vmatprep.subr.mxu0 0.0
        %1426 = vmatpush1.msra.mxu0 0.0
        %1427 = vmatprep.subr.mxu0 0.0
        %1428 = vmatpush1.msra.mxu0 0.0
        %1429 = vmatprep.subr.mxu0 0.0
        %1430 = vmatpush1.msra.mxu0 0.0
        %1431 = vmatprep.subr.mxu0 0.0
        %1432 = vmatpush1.msra.mxu0 0.0
        %1433 = vmatprep.subr.mxu0 0.0
        %1434 = vmatpush1.msra.mxu0 0.0
        %1435 = vmatprep.subr.mxu0 0.0
        %1436 = vmatpush1.msra.mxu0 0.0
        %1437 = vmatprep.subr.mxu0 0.0
        %1438 = vmatpush1.msra.mxu0 0.0
        %1439 = vmatprep.subr.mxu0 0.0
        %1440 = vmatpush1.msra.mxu0 0.0
        %1441 = vmatprep.subr.mxu0 0.0
        %1442 = vmatpush1.msra.mxu0 0.0
        %1443 = vmatprep.subr.mxu0 0.0
        %1444 = vmatpush1.msra.mxu0 0.0
        %1445 = vmatprep.subr.mxu0 0.0
        %1446 = vmatpush1.msra.mxu0 0.0
        %1447 = vmatprep.subr.mxu0 0.0
        %1448 = vmatpush1.msra.mxu0 0.0
        %1449 = vmatprep.subr.mxu0 0.0
        %1450 = vmatpush1.msra.mxu0 0.0
        %1451 = vmatprep.subr.mxu0 0.0
        %1452 = vmatpush1.msra.mxu0 0.0
        %1453 = vmatprep.subr.mxu0 0.0
        %1454 = vmatpush1.msra.mxu0 0.0
        %1455 = vmatprep.mubr.f32.mxu0 0.0
        %1456 = vmatmul.mubr.f32.gmra.mrb[0].mxu0 %v1389
        %v1457 = vpop.f32.mrb[0].mxu0
        %v1458 = vadd.f32 0.0, %v1457
        %v1459 = vpop.f32.mrb[0].mxu0
        %v1460 = vadd.f32 0.0, %v1459
        %1461 = vdwg.mxu0
        %v1463 = vsel %vm583, %v411, 0
        %1465 = vmatprep.subr.mxu0 %v1379
        %1466 = vmatpush1.msra.mxu0 %v1378
        %1467 = vmatprep.subr.mxu0 0.0
        %1468 = vmatpush1.msra.mxu0 0.0
        %1469 = vmatprep.subr.mxu0 0.0
        %1470 = vmatpush1.msra.mxu0 0.0
        %1471 = vmatprep.subr.mxu0 0.0
        %1472 = vmatpush1.msra.mxu0 0.0
        %1473 = vmatprep.subr.mxu0 0.0
        %1474 = vmatpush1.msra.mxu0 0.0
        %1475 = vmatprep.subr.mxu0 0.0
        %1476 = vmatpush1.msra.mxu0 0.0
        %1477 = vmatprep.subr.mxu0 0.0
        %1478 = vmatpush1.msra.mxu0 0.0
        %1479 = vmatprep.subr.mxu0 0.0
        %1480 = vmatpush1.msra.mxu0 0.0
        %1481 = vmatprep.subr.mxu0 0.0
        %1482 = vmatpush1.msra.mxu0 0.0
        %1483 = vmatprep.subr.mxu0 0.0
        %1484 = vmatpush1.msra.mxu0 0.0
        %1485 = vmatprep.subr.mxu0 0.0
        %1486 = vmatpush1.msra.mxu0 0.0
        %1487 = vmatprep.subr.mxu0 0.0
        %1488 = vmatpush1.msra.mxu0 0.0
        %1489 = vmatprep.subr.mxu0 0.0
        %1490 = vmatpush1.msra.mxu0 0.0
        %1491 = vmatprep.subr.mxu0 0.0
        %1492 = vmatpush1.msra.mxu0 0.0
        %1493 = vmatprep.subr.mxu0 0.0
        %1494 = vmatpush1.msra.mxu0 0.0
        %1495 = vmatprep.subr.mxu0 0.0
        %1496 = vmatpush1.msra.mxu0 0.0
        %1497 = vmatprep.subr.mxu0 0.0
        %1498 = vmatpush1.msra.mxu0 0.0
        %1499 = vmatprep.subr.mxu0 0.0
        %1500 = vmatpush1.msra.mxu0 0.0
        %1501 = vmatprep.subr.mxu0 0.0
        %1502 = vmatpush1.msra.mxu0 0.0
        %1503 = vmatprep.subr.mxu0 0.0
        %1504 = vmatpush1.msra.mxu0 0.0
        %1505 = vmatprep.subr.mxu0 0.0
        %1506 = vmatpush1.msra.mxu0 0.0
        %1507 = vmatprep.subr.mxu0 0.0
        %1508 = vmatpush1.msra.mxu0 0.0
        %1509 = vmatprep.subr.mxu0 0.0
        %1510 = vmatpush1.msra.mxu0 0.0
        %1511 = vmatprep.subr.mxu0 0.0
        %1512 = vmatpush1.msra.mxu0 0.0
        %1513 = vmatprep.subr.mxu0 0.0
        %1514 = vmatpush1.msra.mxu0 0.0
        %1515 = vmatprep.subr.mxu0 0.0
        %1516 = vmatpush1.msra.mxu0 0.0
        %1517 = vmatprep.subr.mxu0 0.0
        %1518 = vmatpush1.msra.mxu0 0.0
        %1519 = vmatprep.subr.mxu0 0.0
        %1520 = vmatpush1.msra.mxu0 0.0
        %1521 = vmatprep.subr.mxu0 0.0
        %1522 = vmatpush1.msra.mxu0 0.0
        %1523 = vmatprep.subr.mxu0 0.0
        %1524 = vmatpush1.msra.mxu0 0.0
        %1525 = vmatprep.subr.mxu0 0.0
        %1526 = vmatpush1.msra.mxu0 0.0
        %1527 = vmatprep.subr.mxu0 0.0
        %1528 = vmatpush1.msra.mxu0 0.0
        %1529 = vmatprep.mubr.f32.mxu0 0.0
        %1530 = vmatmul.mubr.f32.gmra.mrb[0].mxu0 %v1463
        %v1531 = vpop.f32.mrb[0].mxu0
        %v1532 = vadd.f32 %v1458, %v1531
        %v1533 = vpop.f32.mrb[0].mxu0
        %v1534 = vadd.f32 %v1460, %v1533
        %1535 = vdwg.mxu0
        %1536 = vrot.lane.b32.xlu0 %v1370, 60
        %v1537 = vpop.permute.xlu0 %1536
        %1538 = vrot.lane.b32.xlu0 %v1371, 60
        %v1539 = vpop.permute.xlu0 %1538
        %v1540 = vsel %vm736, %v1537, %v1539
        %v1541 = vsel %vm736, %v1539, %v1537
        %v1542 = vmul.f32 %v1541, %v743
        %v1543 = vmul.f32 %v1540, %v747
        %v1545 = vsel %vm583, %v415, 0
        %1547 = vmatprep.subr.mxu0 %v1543
        %1548 = vmatpush1.msra.mxu0 %v1542
        %1549 = vmatprep.subr.mxu0 0.0
        %1550 = vmatpush1.msra.mxu0 0.0
        %1551 = vmatprep.subr.mxu0 0.0
        %1552 = vmatpush1.msra.mxu0 0.0
        %1553 = vmatprep.subr.mxu0 0.0
        %1554 = vmatpush1.msra.mxu0 0.0
        %1555 = vmatprep.subr.mxu0 0.0
        %1556 = vmatpush1.msra.mxu0 0.0
        %1557 = vmatprep.subr.mxu0 0.0
        %1558 = vmatpush1.msra.mxu0 0.0
        %1559 = vmatprep.subr.mxu0 0.0
        %1560 = vmatpush1.msra.mxu0 0.0
        %1561 = vmatprep.subr.mxu0 0.0
        %1562 = vmatpush1.msra.mxu0 0.0
        %1563 = vmatprep.subr.mxu0 0.0
        %1564 = vmatpush1.msra.mxu0 0.0
        %1565 = vmatprep.subr.mxu0 0.0
        %1566 = vmatpush1.msra.mxu0 0.0
        %1567 = vmatprep.subr.mxu0 0.0
        %1568 = vmatpush1.msra.mxu0 0.0
        %1569 = vmatprep.subr.mxu0 0.0
        %1570 = vmatpush1.msra.mxu0 0.0
        %1571 = vmatprep.subr.mxu0 0.0
        %1572 = vmatpush1.msra.mxu0 0.0
        %1573 = vmatprep.subr.mxu0 0.0
        %1574 = vmatpush1.msra.mxu0 0.0
        %1575 = vmatprep.subr.mxu0 0.0
        %1576 = vmatpush1.msra.mxu0 0.0
        %1577 = vmatprep.subr.mxu0 0.0
        %1578 = vmatpush1.msra.mxu0 0.0
        %1579 = vmatprep.subr.mxu0 0.0
        %1580 = vmatpush1.msra.mxu0 0.0
        %1581 = vmatprep.subr.mxu0 0.0
        %1582 = vmatpush1.msra.mxu0 0.0
        %1583 = vmatprep.subr.mxu0 0.0
        %1584 = vmatpush1.msra.mxu0 0.0
        %1585 = vmatprep.subr.mxu0 0.0
        %1586 = vmatpush1.msra.mxu0 0.0
        %1587 = vmatprep.subr.mxu0 0.0
        %1588 = vmatpush1.msra.mxu0 0.0
        %1589 = vmatprep.subr.mxu0 0.0
        %1590 = vmatpush1.msra.mxu0 0.0
        %1591 = vmatprep.subr.mxu0 0.0
        %1592 = vmatpush1.msra.mxu0 0.0
        %1593 = vmatprep.subr.mxu0 0.0
        %1594 = vmatpush1.msra.mxu0 0.0
        %1595 = vmatprep.subr.mxu0 0.0
        %1596 = vmatpush1.msra.mxu0 0.0
        %1597 = vmatprep.subr.mxu0 0.0
        %1598 = vmatpush1.msra.mxu0 0.0
        %1599 = vmatprep.subr.mxu0 0.0
        %1600 = vmatpush1.msra.mxu0 0.0
        %1601 = vmatprep.subr.mxu0 0.0
        %1602 = vmatpush1.msra.mxu0 0.0
        %1603 = vmatprep.subr.mxu0 0.0
        %1604 = vmatpush1.msra.mxu0 0.0
        %1605 = vmatprep.subr.mxu0 0.0
        %1606 = vmatpush1.msra.mxu0 0.0
        %1607 = vmatprep.subr.mxu0 0.0
        %1608 = vmatpush1.msra.mxu0 0.0
        %1609 = vmatprep.subr.mxu0 0.0
        %1610 = vmatpush1.msra.mxu0 0.0
        %1611 = vmatprep.mubr.f32.mxu0 0.0
        %1612 = vmatmul.mubr.f32.gmra.mrb[0].mxu0 %v1545
        %v1613 = vpop.f32.mrb[0].mxu0
        %v1614 = vadd.f32 0.0, %v1613
        %v1615 = vpop.f32.mrb[0].mxu0
        %v1616 = vadd.f32 0.0, %v1615
        %1617 = vdwg.mxu0
        %v1618 = vadd.f32 %v1532, %v1614
        %v1619 = vadd.f32 %v1534, %v1616
        %1620 = vrot.lane.b32.xlu0 %v1370, 4
        %v1621 = vpop.permute.xlu0 %1620
        %1622 = vrot.lane.b32.xlu0 %v1371, 4
        %v1623 = vpop.permute.xlu0 %1622
        %v1624 = vsel %vm832, %v1621, %v1623
        %v1625 = vsel %vm832, %v1623, %v1621
        %v1626 = vmul.f32 %v1625, %v839
        %v1627 = vmul.f32 %v1624, %v843
        %v1629 = vsel %vm583, %v417, 0
        %1631 = vmatprep.subr.mxu0 %v1627
        %1632 = vmatpush1.msra.mxu0 %v1626
        %1633 = vmatprep.subr.mxu0 0.0
        %1634 = vmatpush1.msra.mxu0 0.0
        %1635 = vmatprep.subr.mxu0 0.0
        %1636 = vmatpush1.msra.mxu0 0.0
        %1637 = vmatprep.subr.mxu0 0.0
        %1638 = vmatpush1.msra.mxu0 0.0
        %1639 = vmatprep.subr.mxu0 0.0
        %1640 = vmatpush1.msra.mxu0 0.0
        %1641 = vmatprep.subr.mxu0 0.0
        %1642 = vmatpush1.msra.mxu0 0.0
        %1643 = vmatprep.subr.mxu0 0.0
        %1644 = vmatpush1.msra.mxu0 0.0
        %1645 = vmatprep.subr.mxu0 0.0
        %1646 = vmatpush1.msra.mxu0 0.0
        %1647 = vmatprep.subr.mxu0 0.0
        %1648 = vmatpush1.msra.mxu0 0.0
        %1649 = vmatprep.subr.mxu0 0.0
        %1650 = vmatpush1.msra.mxu0 0.0
        %1651 = vmatprep.subr.mxu0 0.0
        %1652 = vmatpush1.msra.mxu0 0.0
        %1653 = vmatprep.subr.mxu0 0.0
        %1654 = vmatpush1.msra.mxu0 0.0
        %1655 = vmatprep.subr.mxu0 0.0
        %1656 = vmatpush1.msra.mxu0 0.0
        %1657 = vmatprep.subr.mxu0 0.0
        %1658 = vmatpush1.msra.mxu0 0.0
        %1659 = vmatprep.subr.mxu0 0.0
        %1660 = vmatpush1.msra.mxu0 0.0
        %1661 = vmatprep.subr.mxu0 0.0
        %1662 = vmatpush1.msra.mxu0 0.0
        %1663 = vmatprep.subr.mxu0 0.0
        %1664 = vmatpush1.msra.mxu0 0.0
        %1665 = vmatprep.subr.mxu0 0.0
        %1666 = vmatpush1.msra.mxu0 0.0
        %1667 = vmatprep.subr.mxu0 0.0
        %1668 = vmatpush1.msra.mxu0 0.0
        %1669 = vmatprep.subr.mxu0 0.0
        %1670 = vmatpush1.msra.mxu0 0.0
        %1671 = vmatprep.subr.mxu0 0.0
        %1672 = vmatpush1.msra.mxu0 0.0
        %1673 = vmatprep.subr.mxu0 0.0
        %1674 = vmatpush1.msra.mxu0 0.0
        %1675 = vmatprep.subr.mxu0 0.0
        %1676 = vmatpush1.msra.mxu0 0.0
        %1677 = vmatprep.subr.mxu0 0.0
        %1678 = vmatpush1.msra.mxu0 0.0
        %1679 = vmatprep.subr.mxu0 0.0
        %1680 = vmatpush1.msra.mxu0 0.0
        %1681 = vmatprep.subr.mxu0 0.0
        %1682 = vmatpush1.msra.mxu0 0.0
        %1683 = vmatprep.subr.mxu0 0.0
        %1684 = vmatpush1.msra.mxu0 0.0
        %1685 = vmatprep.subr.mxu0 0.0
        %1686 = vmatpush1.msra.mxu0 0.0
        %1687 = vmatprep.subr.mxu0 0.0
        %1688 = vmatpush1.msra.mxu0 0.0
        %1689 = vmatprep.subr.mxu0 0.0
        %1690 = vmatpush1.msra.mxu0 0.0
        %1691 = vmatprep.subr.mxu0 0.0
        %1692 = vmatpush1.msra.mxu0 0.0
        %1693 = vmatprep.subr.mxu0 0.0
        %1694 = vmatpush1.msra.mxu0 0.0
        %1695 = vmatprep.mubr.f32.mxu0 0.0
        %1696 = vmatmul.mubr.f32.gmra.mrb[0].mxu0 %v1629
        %v1697 = vpop.f32.mrb[0].mxu0
        %v1698 = vadd.f32 0.0, %v1697
        %v1699 = vpop.f32.mrb[0].mxu0
        %v1700 = vadd.f32 0.0, %v1699
        %1701 = vdwg.mxu0
        %v1702 = vadd.f32 %v1618, %v1698
        %v1703 = vadd.f32 %v1619, %v1700
        %v1705 = vsel %vm583, %v419, 0
        %1707 = vmatprep.subr.mxu0 %v1371
        %1708 = vmatpush1.msra.mxu0 %v1370
        %1709 = vmatprep.subr.mxu0 0.0
        %1710 = vmatpush1.msra.mxu0 0.0
        %1711 = vmatprep.subr.mxu0 0.0
        %1712 = vmatpush1.msra.mxu0 0.0
        %1713 = vmatprep.subr.mxu0 0.0
        %1714 = vmatpush1.msra.mxu0 0.0
        %1715 = vmatprep.subr.mxu0 0.0
        %1716 = vmatpush1.msra.mxu0 0.0
        %1717 = vmatprep.subr.mxu0 0.0
        %1718 = vmatpush1.msra.mxu0 0.0
        %1719 = vmatprep.subr.mxu0 0.0
        %1720 = vmatpush1.msra.mxu0 0.0
        %1721 = vmatprep.subr.mxu0 0.0
        %1722 = vmatpush1.msra.mxu0 0.0
        %1723 = vmatprep.subr.mxu0 0.0
        %1724 = vmatpush1.msra.mxu0 0.0
        %1725 = vmatprep.subr.mxu0 0.0
        %1726 = vmatpush1.msra.mxu0 0.0
        %1727 = vmatprep.subr.mxu0 0.0
        %1728 = vmatpush1.msra.mxu0 0.0
        %1729 = vmatprep.subr.mxu0 0.0
        %1730 = vmatpush1.msra.mxu0 0.0
        %1731 = vmatprep.subr.mxu0 0.0
        %1732 = vmatpush1.msra.mxu0 0.0
        %1733 = vmatprep.subr.mxu0 0.0
        %1734 = vmatpush1.msra.mxu0 0.0
        %1735 = vmatprep.subr.mxu0 0.0
        %1736 = vmatpush1.msra.mxu0 0.0
        %1737 = vmatprep.subr.mxu0 0.0
        %1738 = vmatpush1.msra.mxu0 0.0
        %1739 = vmatprep.subr.mxu0 0.0
        %1740 = vmatpush1.msra.mxu0 0.0
        %1741 = vmatprep.subr.mxu0 0.0
        %1742 = vmatpush1.msra.mxu0 0.0
        %1743 = vmatprep.subr.mxu0 0.0
        %1744 = vmatpush1.msra.mxu0 0.0
        %1745 = vmatprep.subr.mxu0 0.0
        %1746 = vmatpush1.msra.mxu0 0.0
        %1747 = vmatprep.subr.mxu0 0.0
        %1748 = vmatpush1.msra.mxu0 0.0
        %1749 = vmatprep.subr.mxu0 0.0
        %1750 = vmatpush1.msra.mxu0 0.0
        %1751 = vmatprep.subr.mxu0 0.0
        %1752 = vmatpush1.msra.mxu0 0.0
        %1753 = vmatprep.subr.mxu0 0.0
        %1754 = vmatpush1.msra.mxu0 0.0
        %1755 = vmatprep.subr.mxu0 0.0
        %1756 = vmatpush1.msra.mxu0 0.0
        %1757 = vmatprep.subr.mxu0 0.0
        %1758 = vmatpush1.msra.mxu0 0.0
        %1759 = vmatprep.subr.mxu0 0.0
        %1760 = vmatpush1.msra.mxu0 0.0
        %1761 = vmatprep.subr.mxu0 0.0
        %1762 = vmatpush1.msra.mxu0 0.0
        %1763 = vmatprep.subr.mxu0 0.0
        %1764 = vmatpush1.msra.mxu0 0.0
        %1765 = vmatprep.subr.mxu0 0.0
        %1766 = vmatpush1.msra.mxu0 0.0
        %1767 = vmatprep.subr.mxu0 0.0
        %1768 = vmatpush1.msra.mxu0 0.0
        %1769 = vmatprep.subr.mxu0 0.0
        %1770 = vmatpush1.msra.mxu0 0.0
        %1771 = vmatprep.mubr.f32.mxu0 0.0
        %1772 = vmatmul.mubr.f32.gmra.mrb[0].mxu0 %v1705
        %v1773 = vpop.f32.mrb[0].mxu0
        %v1774 = vadd.f32 0.0, %v1773
        %v1775 = vpop.f32.mrb[0].mxu0
        %v1776 = vadd.f32 0.0, %v1775
        %1777 = vdwg.mxu0
        %v1778 = vadd.f32 %v1702, %v1774
        %v1779 = vadd.f32 %v1703, %v1776
        %1780 = vrot.lane.b32.xlu0 %v1370, 124
        %v1781 = vpop.permute.xlu0 %1780
        %1782 = vrot.lane.b32.xlu0 %v1371, 124
        %v1783 = vpop.permute.xlu0 %1782
        %v1784 = vsel %vm1004, %v1781, %v1783
        %v1785 = vsel %vm1004, %v1783, %v1781
        %v1786 = vmul.f32 %v1784, %v1011
        %v1787 = vmul.f32 %v1785, %v1015
        %v1789 = vsel %vm583, %v421, 0
        %1791 = vmatprep.subr.mxu0 %v1787
        %1792 = vmatpush1.msra.mxu0 %v1786
        %1793 = vmatprep.subr.mxu0 0.0
        %1794 = vmatpush1.msra.mxu0 0.0
        %1795 = vmatprep.subr.mxu0 0.0
        %1796 = vmatpush1.msra.mxu0 0.0
        %1797 = vmatprep.subr.mxu0 0.0
        %1798 = vmatpush1.msra.mxu0 0.0
        %1799 = vmatprep.subr.mxu0 0.0
        %1800 = vmatpush1.msra.mxu0 0.0
        %1801 = vmatprep.subr.mxu0 0.0
        %1802 = vmatpush1.msra.mxu0 0.0
        %1803 = vmatprep.subr.mxu0 0.0
        %1804 = vmatpush1.msra.mxu0 0.0
        %1805 = vmatprep.subr.mxu0 0.0
        %1806 = vmatpush1.msra.mxu0 0.0
        %1807 = vmatprep.subr.mxu0 0.0
        %1808 = vmatpush1.msra.mxu0 0.0
        %1809 = vmatprep.subr.mxu0 0.0
        %1810 = vmatpush1.msra.mxu0 0.0
        %1811 = vmatprep.subr.mxu0 0.0
        %1812 = vmatpush1.msra.mxu0 0.0
        %1813 = vmatprep.subr.mxu0 0.0
        %1814 = vmatpush1.msra.mxu0 0.0
        %1815 = vmatprep.subr.mxu0 0.0
        %1816 = vmatpush1.msra.mxu0 0.0
        %1817 = vmatprep.subr.mxu0 0.0
        %1818 = vmatpush1.msra.mxu0 0.0
        %1819 = vmatprep.subr.mxu0 0.0
        %1820 = vmatpush1.msra.mxu0 0.0
        %1821 = vmatprep.subr.mxu0 0.0
        %1822 = vmatpush1.msra.mxu0 0.0
        %1823 = vmatprep.subr.mxu0 0.0
        %1824 = vmatpush1.msra.mxu0 0.0
        %1825 = vmatprep.subr.mxu0 0.0
        %1826 = vmatpush1.msra.mxu0 0.0
        %1827 = vmatprep.subr.mxu0 0.0
        %1828 = vmatpush1.msra.mxu0 0.0
        %1829 = vmatprep.subr.mxu0 0.0
        %1830 = vmatpush1.msra.mxu0 0.0
        %1831 = vmatprep.subr.mxu0 0.0
        %1832 = vmatpush1.msra.mxu0 0.0
        %1833 = vmatprep.subr.mxu0 0.0
        %1834 = vmatpush1.msra.mxu0 0.0
        %1835 = vmatprep.subr.mxu0 0.0
        %1836 = vmatpush1.msra.mxu0 0.0
        %1837 = vmatprep.subr.mxu0 0.0
        %1838 = vmatpush1.msra.mxu0 0.0
        %1839 = vmatprep.subr.mxu0 0.0
        %1840 = vmatpush1.msra.mxu0 0.0
        %1841 = vmatprep.subr.mxu0 0.0
        %1842 = vmatpush1.msra.mxu0 0.0
        %1843 = vmatprep.subr.mxu0 0.0
        %1844 = vmatpush1.msra.mxu0 0.0
        %1845 = vmatprep.subr.mxu0 0.0
        %1846 = vmatpush1.msra.mxu0 0.0
        %1847 = vmatprep.subr.mxu0 0.0
        %1848 = vmatpush1.msra.mxu0 0.0
        %1849 = vmatprep.subr.mxu0 0.0
        %1850 = vmatpush1.msra.mxu0 0.0
        %1851 = vmatprep.subr.mxu0 0.0
        %1852 = vmatpush1.msra.mxu0 0.0
        %1853 = vmatprep.subr.mxu0 0.0
        %1854 = vmatpush1.msra.mxu0 0.0
        %1855 = vmatprep.mubr.f32.mxu0 0.0
        %1856 = vmatmul.mubr.f32.gmra.mrb[0].mxu0 %v1789
        %v1857 = vpop.f32.mrb[0].mxu0
        %v1858 = vadd.f32 0.0, %v1857
        %v1859 = vpop.f32.mrb[0].mxu0
        %v1860 = vadd.f32 0.0, %v1859
        %1861 = vdwg.mxu0
        %v1862 = vadd.f32 %v1778, %v1858
        %v1863 = vadd.f32 %v1779, %v1860
        %v1864 = vmul.f32 %v1376, %v1100
        %v1865 = vmul.f32 %v1377, %v1104
        %v1867 = vsel %vm583, %v423, 0
        %1869 = vmatprep.subr.mxu0 %v1865
        %1870 = vmatpush1.msra.mxu0 %v1864
        %1871 = vmatprep.subr.mxu0 0.0
        %1872 = vmatpush1.msra.mxu0 0.0
        %1873 = vmatprep.subr.mxu0 0.0
        %1874 = vmatpush1.msra.mxu0 0.0
        %1875 = vmatprep.subr.mxu0 0.0
        %1876 = vmatpush1.msra.mxu0 0.0
        %1877 = vmatprep.subr.mxu0 0.0
        %1878 = vmatpush1.msra.mxu0 0.0
        %1879 = vmatprep.subr.mxu0 0.0
        %1880 = vmatpush1.msra.mxu0 0.0
        %1881 = vmatprep.subr.mxu0 0.0
        %1882 = vmatpush1.msra.mxu0 0.0
        %1883 = vmatprep.subr.mxu0 0.0
        %1884 = vmatpush1.msra.mxu0 0.0
        %1885 = vmatprep.subr.mxu0 0.0
        %1886 = vmatpush1.msra.mxu0 0.0
        %1887 = vmatprep.subr.mxu0 0.0
        %1888 = vmatpush1.msra.mxu0 0.0
        %1889 = vmatprep.subr.mxu0 0.0
        %1890 = vmatpush1.msra.mxu0 0.0
        %1891 = vmatprep.subr.mxu0 0.0
        %1892 = vmatpush1.msra.mxu0 0.0
        %1893 = vmatprep.subr.mxu0 0.0
        %1894 = vmatpush1.msra.mxu0 0.0
        %1895 = vmatprep.subr.mxu0 0.0
        %1896 = vmatpush1.msra.mxu0 0.0
        %1897 = vmatprep.subr.mxu0 0.0
        %1898 = vmatpush1.msra.mxu0 0.0
        %1899 = vmatprep.subr.mxu0 0.0
        %1900 = vmatpush1.msra.mxu0 0.0
        %1901 = vmatprep.subr.mxu0 0.0
        %1902 = vmatpush1.msra.mxu0 0.0
        %1903 = vmatprep.subr.mxu0 0.0
        %1904 = vmatpush1.msra.mxu0 0.0
        %1905 = vmatprep.subr.mxu0 0.0
        %1906 = vmatpush1.msra.mxu0 0.0
        %1907 = vmatprep.subr.mxu0 0.0
        %1908 = vmatpush1.msra.mxu0 0.0
        %1909 = vmatprep.subr.mxu0 0.0
        %1910 = vmatpush1.msra.mxu0 0.0
        %1911 = vmatprep.subr.mxu0 0.0
        %1912 = vmatpush1.msra.mxu0 0.0
        %1913 = vmatprep.subr.mxu0 0.0
        %1914 = vmatpush1.msra.mxu0 0.0
        %1915 = vmatprep.subr.mxu0 0.0
        %1916 = vmatpush1.msra.mxu0 0.0
        %1917 = vmatprep.subr.mxu0 0.0
        %1918 = vmatpush1.msra.mxu0 0.0
        %1919 = vmatprep.subr.mxu0 0.0
        %1920 = vmatpush1.msra.mxu0 0.0
        %1921 = vmatprep.subr.mxu0 0.0
        %1922 = vmatpush1.msra.mxu0 0.0
        %1923 = vmatprep.subr.mxu0 0.0
        %1924 = vmatpush1.msra.mxu0 0.0
        %1925 = vmatprep.subr.mxu0 0.0
        %1926 = vmatpush1.msra.mxu0 0.0
        %1927 = vmatprep.subr.mxu0 0.0
        %1928 = vmatpush1.msra.mxu0 0.0
        %1929 = vmatprep.subr.mxu0 0.0
        %1930 = vmatpush1.msra.mxu0 0.0
        %1931 = vmatprep.subr.mxu0 0.0
        %1932 = vmatpush1.msra.mxu0 0.0
        %1933 = vmatprep.mubr.f32.mxu0 0.0
        %1934 = vmatmul.mubr.f32.gmra.mrb[0].mxu0 %v1867
        %v1935 = vpop.f32.mrb[0].mxu0
        %v1936 = vadd.f32 0.0, %v1935
        %v1937 = vpop.f32.mrb[0].mxu0
        %v1938 = vadd.f32 0.0, %v1937
        %1939 = vdwg.mxu0
        %v1940 = vadd.f32 %v1862, %v1936
        %v1941 = vadd.f32 %v1863, %v1938
        %v1942 = vmul.f32 %v1384, %v1189
        %v1943 = vmul.f32 %v1385, %v1193
        %v1945 = vsel %vm583, %v425, 0
        %1947 = vmatprep.subr.mxu0 %v1943
        %1948 = vmatpush1.msra.mxu0 %v1942
        %1949 = vmatprep.subr.mxu0 0.0
        %1950 = vmatpush1.msra.mxu0 0.0
        %1951 = vmatprep.subr.mxu0 0.0
        %1952 = vmatpush1.msra.mxu0 0.0
        %1953 = vmatprep.subr.mxu0 0.0
        %1954 = vmatpush1.msra.mxu0 0.0
        %1955 = vmatprep.subr.mxu0 0.0
        %1956 = vmatpush1.msra.mxu0 0.0
        %1957 = vmatprep.subr.mxu0 0.0
        %1958 = vmatpush1.msra.mxu0 0.0
        %1959 = vmatprep.subr.mxu0 0.0
        %1960 = vmatpush1.msra.mxu0 0.0
        %1961 = vmatprep.subr.mxu0 0.0
        %1962 = vmatpush1.msra.mxu0 0.0
        %1963 = vmatprep.subr.mxu0 0.0
        %1964 = vmatpush1.msra.mxu0 0.0
        %1965 = vmatprep.subr.mxu0 0.0
        %1966 = vmatpush1.msra.mxu0 0.0
        %1967 = vmatprep.subr.mxu0 0.0
        %1968 = vmatpush1.msra.mxu0 0.0
        %1969 = vmatprep.subr.mxu0 0.0
        %1970 = vmatpush1.msra.mxu0 0.0
        %1971 = vmatprep.subr.mxu0 0.0
        %1972 = vmatpush1.msra.mxu0 0.0
        %1973 = vmatprep.subr.mxu0 0.0
        %1974 = vmatpush1.msra.mxu0 0.0
        %1975 = vmatprep.subr.mxu0 0.0
        %1976 = vmatpush1.msra.mxu0 0.0
        %1977 = vmatprep.subr.mxu0 0.0
        %1978 = vmatpush1.msra.mxu0 0.0
        %1979 = vmatprep.subr.mxu0 0.0
        %1980 = vmatpush1.msra.mxu0 0.0
        %1981 = vmatprep.subr.mxu0 0.0
        %1982 = vmatpush1.msra.mxu0 0.0
        %1983 = vmatprep.subr.mxu0 0.0
        %1984 = vmatpush1.msra.mxu0 0.0
        %1985 = vmatprep.subr.mxu0 0.0
        %1986 = vmatpush1.msra.mxu0 0.0
        %1987 = vmatprep.subr.mxu0 0.0
        %1988 = vmatpush1.msra.mxu0 0.0
        %1989 = vmatprep.subr.mxu0 0.0
        %1990 = vmatpush1.msra.mxu0 0.0
        %1991 = vmatprep.subr.mxu0 0.0
        %1992 = vmatpush1.msra.mxu0 0.0
        %1993 = vmatprep.subr.mxu0 0.0
        %1994 = vmatpush1.msra.mxu0 0.0
        %1995 = vmatprep.subr.mxu0 0.0
        %1996 = vmatpush1.msra.mxu0 0.0
        %1997 = vmatprep.subr.mxu0 0.0
        %1998 = vmatpush1.msra.mxu0 0.0
        %1999 = vmatprep.subr.mxu0 0.0
        %2000 = vmatpush1.msra.mxu0 0.0
        %2001 = vmatprep.subr.mxu0 0.0
        %2002 = vmatpush1.msra.mxu0 0.0
        %2003 = vmatprep.subr.mxu0 0.0
        %2004 = vmatpush1.msra.mxu0 0.0
        %2005 = vmatprep.subr.mxu0 0.0
        %2006 = vmatpush1.msra.mxu0 0.0
        %2007 = vmatprep.subr.mxu0 0.0
        %2008 = vmatpush1.msra.mxu0 0.0
        %2009 = vmatprep.subr.mxu0 0.0
        %2010 = vmatpush1.msra.mxu0 0.0
        %2011 = vmatprep.mubr.f32.mxu0 0.0
        %2012 = vmatmul.mubr.f32.gmra.mrb[0].mxu0 %v1945
        %v2013 = vpop.f32.mrb[0].mxu0
        %v2014 = vadd.f32 0.0, %v2013
        %v2015 = vpop.f32.mrb[0].mxu0
        %v2016 = vadd.f32 0.0, %v2015
        %2017 = vdwg.mxu0
        %v2018 = vadd.f32 %v1940, %v2014
        %v2019 = vadd.f32 %v1941, %v2016
        %v2020 = vmul.f32 %v1540, %v1278
        %v2021 = vmul.f32 %v1541, %v1282
        %v2023 = vsel %vm583, %v427, 0
        %2025 = vmatprep.subr.mxu0 %v2021
        %2026 = vmatpush1.msra.mxu0 %v2020
        %2027 = vmatprep.subr.mxu0 0.0
        %2028 = vmatpush1.msra.mxu0 0.0
        %2029 = vmatprep.subr.mxu0 0.0
        %2030 = vmatpush1.msra.mxu0 0.0
        %2031 = vmatprep.subr.mxu0 0.0
        %2032 = vmatpush1.msra.mxu0 0.0
        %2033 = vmatprep.subr.mxu0 0.0
        %2034 = vmatpush1.msra.mxu0 0.0
        %2035 = vmatprep.subr.mxu0 0.0
        %2036 = vmatpush1.msra.mxu0 0.0
        %2037 = vmatprep.subr.mxu0 0.0
        %2038 = vmatpush1.msra.mxu0 0.0
        %2039 = vmatprep.subr.mxu0 0.0
        %2040 = vmatpush1.msra.mxu0 0.0
        %2041 = vmatprep.subr.mxu0 0.0
        %2042 = vmatpush1.msra.mxu0 0.0
        %2043 = vmatprep.subr.mxu0 0.0
        %2044 = vmatpush1.msra.mxu0 0.0
        %2045 = vmatprep.subr.mxu0 0.0
        %2046 = vmatpush1.msra.mxu0 0.0
        %2047 = vmatprep.subr.mxu0 0.0
        %2048 = vmatpush1.msra.mxu0 0.0
        %2049 = vmatprep.subr.mxu0 0.0
        %2050 = vmatpush1.msra.mxu0 0.0
        %2051 = vmatprep.subr.mxu0 0.0
        %2052 = vmatpush1.msra.mxu0 0.0
        %2053 = vmatprep.subr.mxu0 0.0
        %2054 = vmatpush1.msra.mxu0 0.0
        %2055 = vmatprep.subr.mxu0 0.0
        %2056 = vmatpush1.msra.mxu0 0.0
        %2057 = vmatprep.subr.mxu0 0.0
        %2058 = vmatpush1.msra.mxu0 0.0
        %2059 = vmatprep.subr.mxu0 0.0
        %2060 = vmatpush1.msra.mxu0 0.0
        %2061 = vmatprep.subr.mxu0 0.0
        %2062 = vmatpush1.msra.mxu0 0.0
        %2063 = vmatprep.subr.mxu0 0.0
        %2064 = vmatpush1.msra.mxu0 0.0
        %2065 = vmatprep.subr.mxu0 0.0
        %2066 = vmatpush1.msra.mxu0 0.0
        %2067 = vmatprep.subr.mxu0 0.0
        %2068 = vmatpush1.msra.mxu0 0.0
        %2069 = vmatprep.subr.mxu0 0.0
        %2070 = vmatpush1.msra.mxu0 0.0
        %2071 = vmatprep.subr.mxu0 0.0
        %2072 = vmatpush1.msra.mxu0 0.0
        %2073 = vmatprep.subr.mxu0 0.0
        %2074 = vmatpush1.msra.mxu0 0.0
        %2075 = vmatprep.subr.mxu0 0.0
        %2076 = vmatpush1.msra.mxu0 0.0
        %2077 = vmatprep.subr.mxu0 0.0
        %2078 = vmatpush1.msra.mxu0 0.0
        %2079 = vmatprep.subr.mxu0 0.0
        %2080 = vmatpush1.msra.mxu0 0.0
        %2081 = vmatprep.subr.mxu0 0.0
        %2082 = vmatpush1.msra.mxu0 0.0
        %2083 = vmatprep.subr.mxu0 0.0
        %2084 = vmatpush1.msra.mxu0 0.0
        %2085 = vmatprep.subr.mxu0 0.0
        %2086 = vmatpush1.msra.mxu0 0.0
        %2087 = vmatprep.subr.mxu0 0.0
        %2088 = vmatpush1.msra.mxu0 0.0
        %2089 = vmatprep.mubr.f32.mxu0 0.0
        %2090 = vmatmul.mubr.f32.gmra.mrb[0].mxu0 %v2023
        %v2091 = vpop.f32.mrb[0].mxu0
        %v2092 = vadd.f32 0.0, %v2091
        %v2093 = vpop.f32.mrb[0].mxu0
        %v2094 = vadd.f32 0.0, %v2093
        %2095 = vdwg.mxu0
        %v2096 = vadd.f32 %v2018, %v2092
        %v2097 = vadd.f32 %v2019, %v2094
        %2099 = vset.pattern.permute.xlu0 0
        %2100 = vperm.xlu0 %2099, %v391
        %v2101 = vpop.permute.xlu0 %2100
        %v2103 = vadd.f32 %v2096, %v2101
        %v2104 = vadd.f32 %v2097, %v2101
        %v2105 = vmax.f32 %v2103, 0.0
        %v2106 = vmax.f32 %v2104, 0.0
        %2108 = vset.pattern.permute.xlu0 0
        %2109 = vperm.xlu0 %2108, %v393
        %v2110 = vpop.permute.xlu0 %2109
        %v2112 = vlaneseq
        %v2113 = vshrl.u32 %v2112, 7
        %v2114 = vsub.s32 0, %v2113
        %v2115 = vrot.slane %v2110, %v2114
        %v2117 = vsel %vm583, %v392, 0
        %2119 = vmatprep.subr.mxu0 %v2106
        %2120 = vmatpush1.msra.mxu0 %v2105
        %2121 = vmatprep.subr.mxu0 0.0
        %2122 = vmatpush1.msra.mxu0 0.0
        %2123 = vmatprep.subr.mxu0 0.0
        %2124 = vmatpush1.msra.mxu0 0.0
        %2125 = vmatprep.subr.mxu0 0.0
        %2126 = vmatpush1.msra.mxu0 0.0
        %2127 = vmatprep.subr.mxu0 0.0
        %2128 = vmatpush1.msra.mxu0 0.0
        %2129 = vmatprep.subr.mxu0 0.0
        %2130 = vmatpush1.msra.mxu0 0.0
        %2131 = vmatprep.subr.mxu0 0.0
        %2132 = vmatpush1.msra.mxu0 0.0
        %2133 = vmatprep.subr.mxu0 0.0
        %2134 = vmatpush1.msra.mxu0 0.0
        %2135 = vmatprep.subr.mxu0 0.0
        %2136 = vmatpush1.msra.mxu0 0.0
        %2137 = vmatprep.subr.mxu0 0.0
        %2138 = vmatpush1.msra.mxu0 0.0
        %2139 = vmatprep.subr.mxu0 0.0
        %2140 = vmatpush1.msra.mxu0 0.0
        %2141 = vmatprep.subr.mxu0 0.0
        %2142 = vmatpush1.msra.mxu0 0.0
        %2143 = vmatprep.subr.mxu0 0.0
        %2144 = vmatpush1.msra.mxu0 0.0
        %2145 = vmatprep.subr.mxu0 0.0
        %2146 = vmatpush1.msra.mxu0 0.0
        %2147 = vmatprep.subr.mxu0 0.0
        %2148 = vmatpush1.msra.mxu0 0.0
        %2149 = vmatprep.subr.mxu0 0.0
        %2150 = vmatpush1.msra.mxu0 0.0
        %2151 = vmatprep.subr.mxu0 0.0
        %2152 = vmatpush1.msra.mxu0 0.0
        %2153 = vmatprep.subr.mxu0 0.0
        %2154 = vmatpush1.msra.mxu0 0.0
        %2155 = vmatprep.subr.mxu0 0.0
        %2156 = vmatpush1.msra.mxu0 0.0
        %2157 = vmatprep.subr.mxu0 0.0
        %2158 = vmatpush1.msra.mxu0 0.0
        %2159 = vmatprep.subr.mxu0 0.0
        %2160 = vmatpush1.msra.mxu0 0.0
        %2161 = vmatprep.subr.mxu0 0.0
        %2162 = vmatpush1.msra.mxu0 0.0
        %2163 = vmatprep.subr.mxu0 0.0
        %2164 = vmatpush1.msra.mxu0 0.0
        %2165 = vmatprep.subr.mxu0 0.0
        %2166 = vmatpush1.msra.mxu0 0.0
        %2167 = vmatprep.subr.mxu0 0.0
        %2168 = vmatpush1.msra.mxu0 0.0
        %2169 = vmatprep.subr.mxu0 0.0
        %2170 = vmatpush1.msra.mxu0 0.0
        %2171 = vmatprep.subr.mxu0 0.0
        %2172 = vmatpush1.msra.mxu0 0.0
        %2173 = vmatprep.subr.mxu0 0.0
        %2174 = vmatpush1.msra.mxu0 0.0
        %2175 = vmatprep.subr.mxu0 0.0
        %2176 = vmatpush1.msra.mxu0 0.0
        %2177 = vmatprep.subr.mxu0 0.0
        %2178 = vmatpush1.msra.mxu0 0.0
        %2179 = vmatprep.subr.mxu0 0.0
        %2180 = vmatpush1.msra.mxu0 0.0
        %2181 = vmatprep.subr.mxu0 0.0
        %2182 = vmatpush1.msra.mxu0 0.0
        %2183 = vmatprep.mubr.f32.mxu0 0.0
        %2184 = vmatmul.mubr.f32.gmra.mrb[0].mxu0 %v2117
        %v2185 = vpop.f32.mrb[0].mxu0
        %v2186 = vadd.f32 %v2115, %v2185
        %v2187 = vpop.f32.mrb[0].mxu0
        %v2188 = vadd.f32 %v2115, %v2187
        %2189 = vdwg.mxu0
        %v2192 = vcombine.low %v2186, %v2188
        %v2194 = vunpack.c.l.s4 1966171168
        %v2195 = vunpack.c.0.s8 %v2194
        %v2196 = vlaneseq
        %v2197 = vshrl.u32 %v2196, 7
        %v2198 = vsub.s32 %v2195, %v2197
        %v2199 = vrot.slane %v2192, %v2198
        %v2201 = vunpack.c.l.s4 1966171168
        %v2202 = vunpack.c.0.s8 %v2201
        %v2203 = vlaneseq
        %v2204 = vshrl.u32 %v2203, 7
        %v2205 = vsub.s32 %v2202, %v2204
        %v2206 = vrot.slane %v2199, %v2205
        %v2208 = vlaneseq
        %vm2209 = vcmp.ge.s32.totalorder %v2208, 0
        %vm2210 = vcmp.lt.s32.totalorder %v2208, 256
        %vm2211 = vmand %vm2209, %vm2210
        %2212 = vst.msk [vmem:[%s382] sm:$0x3] %vm2211, %v2206
        %s2213 = sand.u32 %s251, 1
        %s2214 = scalar_lea.sflag [#allocation5], %s2213
        %s2215 = sand.u32 %s251, 1
        %s2216 = smul.addr %s2215, 2
        %s2217 = scalar_lea.vmem [#allocation8], %s2216
        // Predicated region
        $region69: #{tpu_custom_call.1} parent=59 // pred_check
          %p2218 = pneg %p261
        $region70: #{tpu_custom_call.1} parent=59 // pred_check_branch
          %2220 = sbr.rel (%p2218) target = $region72
        $region71: #{tpu_custom_call.1} parent=59 // pred_region
          %s2222 = ssub.s32 32, 32
          %2223 = vsyncadd %s2214, %s2222
          %s2224 = smul.addr %s28, 2
          %s2225 = smul.addr %s2224, 16
          %s2226 = scalar_lea.hbm %s10, %s2225
          %s2228 = sshll.u32 %s2217, 4
          %s2229 = int_to_ptr.vmem [resolvable:$true] %s2228
          %2231 = dma.vmem_to_hbm [thread:$0]  %s2229, 32, %s2226, %s2214
        $region72: #{tpu_custom_call.1} parent=59 // pred_fallthru
          _
      $region60: #{tpu_custom_call.1} parent=5 // pred_fallthru
        _
      %p2232 = scmp.le.s32.totalorder 2, %s23
      // Predicated region
      $region73: #{tpu_custom_call.1} parent=5 // pred_check
        %p2233 = pneg %p2232
      $region74: #{tpu_custom_call.1} parent=5 // pred_check_branch
        %2235 = sbr.rel (%p2233) target = $region76
      $region75: #{tpu_custom_call.1} parent=5 // pred_region
        %s2236 = ssub.s32 %s23, 2
        // Predicated region
        $region77: #{tpu_custom_call.1} parent=75 // pred_check
          %p2237 = pneg %p267
        $region78: #{tpu_custom_call.1} parent=75 // pred_check_branch
          %2239 = sbr.rel (%p2237) target = $region80
        $region79: #{tpu_custom_call.1} parent=75 // pred_region
          %s2240 = sand.u32 %s252, 1
          %s2241 = scalar_lea.sflag [#allocation5], %s2240
          %s2242 = sand.u32 %s252, 1
          %s2243 = smul.addr %s2242, 2
          %s2244 = scalar_lea.vmem [#allocation8], %s2243
          %2245 = dma.done %s2241, 32
        $region80: #{tpu_custom_call.1} parent=75 // pred_fallthru
          _
      $region76: #{tpu_custom_call.1} parent=5 // pred_fallthru
        _
    $region6: #{tpu_custom_call.1} parent=1 // loop_footer
      %s27 = sadd.s32 1, %s23
    $region7: #{tpu_custom_call.1} parent=1 // loop_footer_branch
      %22 = sbr.rel target = $region3
    $region8: #{tpu_custom_call.1} parent=1 // loop_exit
      _
    %2246 = vsyncpa [#allocation4], 1
    %s2247 = scalar_lea.sflag [#allocation4], 1
    %2248 = vsyncpa %s2247, 1
    %2249 = vsyncpa [#allocation7], 1
    %2250 = vsyncpa [#allocation5], 1
    %s2251 = scalar_lea.sflag [#allocation5], 1
    %2252 = vsyncpa %s2251, 1

</llo_original>
